<compile_context>
chip_gen: v7x
topology: tpu7x:2x2x1
jax: 0.10.0
libtpu: 0.0.40
codegen_flags: <defaults>
</compile_context>

<pallas_src>
import jax
import jax.numpy as jnp
from jax.experimental import pallas as pl
from jax.experimental.pallas import tpu as pltpu


def _round_up(x, m):
    return (x + m - 1) // m * m


# ---------------------------------------------------------------------------
# Fused Pallas kernel: all RNN layers + FC on last timestep
# ---------------------------------------------------------------------------
def make_fused_rnn_kernel(num_layers, T, B):
    """Kernel arg order: x, (w_ih, w_hh, b) * num_layers, fc_w, fc_b, out."""

    def kernel(*args):
        x_ref = args[0]
        layer_refs = args[1:1 + 3 * num_layers]
        fc_w_ref, fc_b_ref, out_ref = args[1 + 3 * num_layers:]

        # Flatten time-major input to one lane-dense slab (T*B, E).
        x = x_ref[...].reshape(T * B, x_ref.shape[-1])

        h = None
        for l in range(num_layers):
            # Hoisted: read weights / bias once per layer, not per timestep.
            w_ih = layer_refs[3 * l][...]
            w_hh = layer_refs[3 * l + 1][...]
            b = layer_refs[3 * l + 2][...]

            # Hoisted input projection: one MXU matmul over all timesteps
            # (M = T*B), removing half the matmuls from the serial path.
            proj = jnp.dot(x, w_ih, preferred_element_type=jnp.float32) + b

            last_layer = (l == num_layers - 1)
            outs = []
            # Fully unrolled time loop (T static & small): scheduler can overlap
            # step t's h@W_hh with step t-1's tanh/stores.
            for t in range(T):
                p_t = proj[t * B:(t + 1) * B, :]
                if t == 0:
                    h = jnp.tanh(p_t)  # h_{-1} == 0, so h@W_hh vanishes
                else:
                    h = jnp.tanh(
                        jnp.dot(h, w_hh, preferred_element_type=jnp.float32)
                        + p_t)
                if not last_layer:
                    outs.append(h)
            if not last_layer:
                # Hidden sequence stays on-chip as the next layer's input.
                x = jnp.concatenate(outs, axis=0)  # (T*B, H)

        # Final Linear on the last timestep of the last layer only.
        out_ref[...] = (
            jnp.dot(h, fc_w_ref[...], preferred_element_type=jnp.float32)
            + fc_b_ref[...]
        )

    return kernel


# ---------------------------------------------------------------------------
# Wrapper
# ---------------------------------------------------------------------------
def rnn_forward(tokens, emb_table, layer_params, fc_w, fc_b):
    B, T = tokens.shape
    E = emb_table.shape[1]
    H = layer_params[0][1].shape[0]
    O = fc_w.shape[1]
    num_layers = len(layer_params)

    # Pad to hardware tiles: batch -> multiple of 8 (sublane), features -> 128
    # (lane). Zero padding is exact in f32 and keeps padded hidden lanes at 0.
    B_pad = _round_up(B, 8)
    E_pad = _round_up(E, 128)
    H_pad = _round_up(H, 128)
    O_pad = _round_up(O, 128)

    # Embedding lookup (glue, plain JAX gather): (B, T) -> (B, T, E);
    # then time-major + padded: (T, B_pad, E_pad).
    emb = jnp.take(emb_table, tokens, axis=0)
    x = jnp.transpose(emb, (1, 0, 2))
    x = jnp.pad(x, ((0, 0), (0, B_pad - B), (0, E_pad - E)))

    padded_params = []
    in_pad, in_size = E_pad, E
    for (w_ih, w_hh, b) in layer_params:
        padded_params.append((
            jnp.pad(w_ih, ((0, in_pad - in_size), (0, H_pad - H))),
            jnp.pad(w_hh, ((0, H_pad - H), (0, H_pad - H))),
            jnp.pad(b, ((0, 0), (0, H_pad - H))),
        ))
        in_pad, in_size = H_pad, H

    fc_w_p = jnp.pad(fc_w, ((0, H_pad - H), (0, O_pad - O)))
    fc_b_p = jnp.pad(fc_b, ((0, 0), (0, O_pad - O)))

    kernel = make_fused_rnn_kernel(num_layers, T, B_pad)

    flat_inputs = [x]
    in_specs = [pl.BlockSpec((T, B_pad, E_pad), lambda i: (0, 0, 0))]
    prev = E_pad
    for (w_ih_p, w_hh_p, b_p) in padded_params:
        flat_inputs += [w_ih_p, w_hh_p, b_p]
        in_specs += [
            pl.BlockSpec((prev, H_pad), lambda i: (0, 0)),
            pl.BlockSpec((H_pad, H_pad), lambda i: (0, 0)),
            pl.BlockSpec((1, H_pad), lambda i: (0, 0)),
        ]
        prev = H_pad
    flat_inputs += [fc_w_p, fc_b_p]
    in_specs += [
        pl.BlockSpec((H_pad, O_pad), lambda i: (0, 0)),
        pl.BlockSpec((1, O_pad), lambda i: (0, 0)),
    ]

    out_pad = pl.pallas_call(
        kernel,
        out_shape=jax.ShapeDtypeStruct((B_pad, O_pad), jnp.float32),
        grid=(1,),
        in_specs=in_specs,
        out_specs=pl.BlockSpec((B_pad, O_pad), lambda i: (0, 0)),
        compiler_params=pltpu.CompilerParams(
            dimension_semantics=("arbitrary",)),
    )(*flat_inputs)

    return out_pad[:B, :O]


# ---------------------------------------------------------------------------
# Pure-JAX reference (mirrors the PyTorch module)
# ---------------------------------------------------------------------------
def rnn_reference(tokens, emb_table, layer_params, fc_w, fc_b):
    emb = jnp.take(emb_table, tokens, axis=0)
    x = jnp.transpose(emb, (1, 0, 2))          # (T, B, E)
    for (w_ih, w_hh, b) in layer_params:
        B = x.shape[1]
        H = w_hh.shape[0]
        h = jnp.zeros((B, H), jnp.float32)
        outs = []
        for t in range(x.shape[0]):
            h = jnp.tanh(x[t] @ w_ih + h @ w_hh + b)
            outs.append(h)
        x = jnp.stack(outs, axis=0)
    return x[-1] @ fc_w + fc_b


# ---------------------------------------------------------------------------
# Main
# ---------------------------------------------------------------------------
if __name__ == "__main__":
    vocab_size, emb_size, padding_idx = 100, 32, 0
    output_size, hidden_size, num_layers = 4, 32, 2
    B, T = 2, 8

    key = jax.random.PRNGKey(0)
    keys = jax.random.split(key, 16)

    # Embedding table (padding row zeroed, matching nn.Embedding padding_idx)
    emb_table = jax.random.normal(keys[0], (vocab_size, emb_size), jnp.float32)
    emb_table = emb_table.at[padding_idx].set(0.0)

    k = 1.0 / (hidden_size ** 0.5)
    layer_params = []
    in_size = emb_size
    for l in range(num_layers):
        w_ih = jax.random.uniform(keys[1 + 3 * l], (in_size, hidden_size),
                                  jnp.float32, -k, k)
        w_hh = jax.random.uniform(keys[2 + 3 * l], (hidden_size, hidden_size),
                                  jnp.float32, -k, k)
        b = jax.random.uniform(keys[3 + 3 * l], (1, hidden_size),
                               jnp.float32, -k, k)   # b_ih + b_hh folded
        layer_params.append((w_ih, w_hh, b))
        in_size = hidden_size

    fc_w = jax.random.uniform(keys[10], (hidden_size, output_size),
                              jnp.float32, -k, k)
    fc_b = jax.random.uniform(keys[11], (1, output_size), jnp.float32, -k, k)

    tokens = jax.random.randint(keys[12], (B, T), 0, vocab_size)

    out = rnn_forward(tokens, emb_table, layer_params, fc_w, fc_b)
    out = jax.block_until_ready(out)

    ref = rnn_reference(tokens, emb_table, layer_params, fc_w, fc_b)
    assert out.shape == (B, output_size)
    assert jnp.allclose(out, ref, atol=1e-5, rtol=1e-5)

    print("KERNEL_OK")
</pallas_src>

<mosaic_0001>
module attributes {stable_mosaic.version = 11 : i64} {
  func.func @kernel(%arg0: i32, %arg1: memref<8x8x128xf32, #tpu.memory_space<vmem>>, %arg2: memref<128x128xf32, #tpu.memory_space<vmem>>, %arg3: memref<128x128xf32, #tpu.memory_space<vmem>>, %arg4: memref<1x128xf32, #tpu.memory_space<vmem>>, %arg5: memref<128x128xf32, #tpu.memory_space<vmem>>, %arg6: memref<128x128xf32, #tpu.memory_space<vmem>>, %arg7: memref<1x128xf32, #tpu.memory_space<vmem>>, %arg8: memref<128x128xf32, #tpu.memory_space<vmem>>, %arg9: memref<1x128xf32, #tpu.memory_space<vmem>>, %arg10: memref<8x128xf32, #tpu.memory_space<vmem>>) attributes {dimension_semantics = [#tpu.dimension_semantics<arbitrary>], iteration_bounds = array<i64: 1>, scalar_prefetch = 0 : i64, scratch_operands = 0 : i64, tpu.core_type = #tpu.core_type<tc>, window_params = [{pipeline_mode = #tpu.pipeline_mode<synchronous>, transform_indices = @transform_0, window_bounds = array<i64: 8, 8, 128>}, {pipeline_mode = #tpu.pipeline_mode<synchronous>, transform_indices = @transform_1, window_bounds = array<i64: 128, 128>}, {pipeline_mode = #tpu.pipeline_mode<synchronous>, transform_indices = @transform_2, window_bounds = array<i64: 128, 128>}, {pipeline_mode = #tpu.pipeline_mode<synchronous>, transform_indices = @transform_3, window_bounds = array<i64: 1, 128>}, {pipeline_mode = #tpu.pipeline_mode<synchronous>, transform_indices = @transform_4, window_bounds = array<i64: 128, 128>}, {pipeline_mode = #tpu.pipeline_mode<synchronous>, transform_indices = @transform_5, window_bounds = array<i64: 128, 128>}, {pipeline_mode = #tpu.pipeline_mode<synchronous>, transform_indices = @transform_6, window_bounds = array<i64: 1, 128>}, {pipeline_mode = #tpu.pipeline_mode<synchronous>, transform_indices = @transform_7, window_bounds = array<i64: 128, 128>}, {pipeline_mode = #tpu.pipeline_mode<synchronous>, transform_indices = @transform_8, window_bounds = array<i64: 1, 128>}, {pipeline_mode = #tpu.pipeline_mode<synchronous>, transform_indices = @transform_9, window_bounds = array<i64: 8, 128>}]} {
    %c0 = arith.constant 0 : index
    %c0_0 = arith.constant 0 : index
    %c0_1 = arith.constant 0 : index
    %0 = vector.load %arg1[%c0, %c0_0, %c0_1] : memref<8x8x128xf32, #tpu.memory_space<vmem>>, vector<8x8x128xf32>
    %1 = vector.shape_cast %0 : vector<8x8x128xf32> to vector<64x128xf32>
    %c0_2 = arith.constant 0 : index
    %c0_3 = arith.constant 0 : index
    %2 = vector.load %arg2[%c0_2, %c0_3] : memref<128x128xf32, #tpu.memory_space<vmem>>, vector<128x128xf32>
    %c0_4 = arith.constant 0 : index
    %c0_5 = arith.constant 0 : index
    %3 = vector.load %arg3[%c0_4, %c0_5] : memref<128x128xf32, #tpu.memory_space<vmem>>, vector<128x128xf32>
    %c0_6 = arith.constant 0 : index
    %c0_7 = arith.constant 0 : index
    %4 = vector.load %arg4[%c0_6, %c0_7] : memref<1x128xf32, #tpu.memory_space<vmem>>, vector<1x128xf32>
    %cst = arith.constant dense<0.000000e+00> : vector<64x128xf32>
    %5 = tpu.matmul %1, %2, %cst {dimension_numbers = #tpu.dot_dimension_numbers<[1], [0], [0], [1], [0, 0, 1, 1], [], []>} : vector<64x128xf32>, vector<128x128xf32>, vector<64x128xf32> -> vector<64x128xf32>
    %6 = vector.broadcast %4 : vector<1x128xf32> to vector<64x128xf32>
    %7 = arith.addf %5, %6 : vector<64x128xf32>
    %8 = vector.extract_strided_slice %7 {offsets = [0, 0], sizes = [8, 128], strides = [1, 1]} : vector<64x128xf32> to vector<8x128xf32>
    %9 = math.tanh %8 : vector<8x128xf32>
    %10 = vector.extract_strided_slice %7 {offsets = [8, 0], sizes = [8, 128], strides = [1, 1]} : vector<64x128xf32> to vector<8x128xf32>
    %cst_8 = arith.constant dense<0.000000e+00> : vector<8x128xf32>
    %11 = tpu.matmul %9, %3, %cst_8 {dimension_numbers = #tpu.dot_dimension_numbers<[1], [0], [0], [1], [0, 0, 1, 1], [], []>} : vector<8x128xf32>, vector<128x128xf32>, vector<8x128xf32> -> vector<8x128xf32>
    %12 = arith.addf %11, %10 : vector<8x128xf32>
    %13 = math.tanh %12 : vector<8x128xf32>
    %14 = vector.extract_strided_slice %7 {offsets = [16, 0], sizes = [8, 128], strides = [1, 1]} : vector<64x128xf32> to vector<8x128xf32>
    %cst_9 = arith.constant dense<0.000000e+00> : vector<8x128xf32>
    %15 = tpu.matmul %13, %3, %cst_9 {dimension_numbers = #tpu.dot_dimension_numbers<[1], [0], [0], [1], [0, 0, 1, 1], [], []>} : vector<8x128xf32>, vector<128x128xf32>, vector<8x128xf32> -> vector<8x128xf32>
    %16 = arith.addf %15, %14 : vector<8x128xf32>
    %17 = math.tanh %16 : vector<8x128xf32>
    %18 = vector.extract_strided_slice %7 {offsets = [24, 0], sizes = [8, 128], strides = [1, 1]} : vector<64x128xf32> to vector<8x128xf32>
    %cst_10 = arith.constant dense<0.000000e+00> : vector<8x128xf32>
    %19 = tpu.matmul %17, %3, %cst_10 {dimension_numbers = #tpu.dot_dimension_numbers<[1], [0], [0], [1], [0, 0, 1, 1], [], []>} : vector<8x128xf32>, vector<128x128xf32>, vector<8x128xf32> -> vector<8x128xf32>
    %20 = arith.addf %19, %18 : vector<8x128xf32>
    %21 = math.tanh %20 : vector<8x128xf32>
    %22 = vector.extract_strided_slice %7 {offsets = [32, 0], sizes = [8, 128], strides = [1, 1]} : vector<64x128xf32> to vector<8x128xf32>
    %cst_11 = arith.constant dense<0.000000e+00> : vector<8x128xf32>
    %23 = tpu.matmul %21, %3, %cst_11 {dimension_numbers = #tpu.dot_dimension_numbers<[1], [0], [0], [1], [0, 0, 1, 1], [], []>} : vector<8x128xf32>, vector<128x128xf32>, vector<8x128xf32> -> vector<8x128xf32>
    %24 = arith.addf %23, %22 : vector<8x128xf32>
    %25 = math.tanh %24 : vector<8x128xf32>
    %26 = vector.extract_strided_slice %7 {offsets = [40, 0], sizes = [8, 128], strides = [1, 1]} : vector<64x128xf32> to vector<8x128xf32>
    %cst_12 = arith.constant dense<0.000000e+00> : vector<8x128xf32>
    %27 = tpu.matmul %25, %3, %cst_12 {dimension_numbers = #tpu.dot_dimension_numbers<[1], [0], [0], [1], [0, 0, 1, 1], [], []>} : vector<8x128xf32>, vector<128x128xf32>, vector<8x128xf32> -> vector<8x128xf32>
    %28 = arith.addf %27, %26 : vector<8x128xf32>
    %29 = math.tanh %28 : vector<8x128xf32>
    %30 = vector.extract_strided_slice %7 {offsets = [48, 0], sizes = [8, 128], strides = [1, 1]} : vector<64x128xf32> to vector<8x128xf32>
    %cst_13 = arith.constant dense<0.000000e+00> : vector<8x128xf32>
    %31 = tpu.matmul %29, %3, %cst_13 {dimension_numbers = #tpu.dot_dimension_numbers<[1], [0], [0], [1], [0, 0, 1, 1], [], []>} : vector<8x128xf32>, vector<128x128xf32>, vector<8x128xf32> -> vector<8x128xf32>
    %32 = arith.addf %31, %30 : vector<8x128xf32>
    %33 = math.tanh %32 : vector<8x128xf32>
    %34 = vector.extract_strided_slice %7 {offsets = [56, 0], sizes = [8, 128], strides = [1, 1]} : vector<64x128xf32> to vector<8x128xf32>
    %cst_14 = arith.constant dense<0.000000e+00> : vector<8x128xf32>
    %35 = tpu.matmul %33, %3, %cst_14 {dimension_numbers = #tpu.dot_dimension_numbers<[1], [0], [0], [1], [0, 0, 1, 1], [], []>} : vector<8x128xf32>, vector<128x128xf32>, vector<8x128xf32> -> vector<8x128xf32>
    %36 = arith.addf %35, %34 : vector<8x128xf32>
    %37 = math.tanh %36 : vector<8x128xf32>
    %38 = tpu.concatenate %9, %13, %17, %21, %25, %29, %33, %37 in 0 : vector<8x128xf32>, vector<8x128xf32>, vector<8x128xf32>, vector<8x128xf32>, vector<8x128xf32>, vector<8x128xf32>, vector<8x128xf32>, vector<8x128xf32> -> vector<64x128xf32>
    %c0_15 = arith.constant 0 : index
    %c0_16 = arith.constant 0 : index
    %39 = vector.load %arg5[%c0_15, %c0_16] : memref<128x128xf32, #tpu.memory_space<vmem>>, vector<128x128xf32>
    %c0_17 = arith.constant 0 : index
    %c0_18 = arith.constant 0 : index
    %40 = vector.load %arg6[%c0_17, %c0_18] : memref<128x128xf32, #tpu.memory_space<vmem>>, vector<128x128xf32>
    %c0_19 = arith.constant 0 : index
    %c0_20 = arith.constant 0 : index
    %41 = vector.load %arg7[%c0_19, %c0_20] : memref<1x128xf32, #tpu.memory_space<vmem>>, vector<1x128xf32>
    %cst_21 = arith.constant dense<0.000000e+00> : vector<64x128xf32>
    %42 = tpu.matmul %38, %39, %cst_21 {dimension_numbers = #tpu.dot_dimension_numbers<[1], [0], [0], [1], [0, 0, 1, 1], [], []>} : vector<64x128xf32>, vector<128x128xf32>, vector<64x128xf32> -> vector<64x128xf32>
    %43 = vector.broadcast %41 : vector<1x128xf32> to vector<64x128xf32>
    %44 = arith.addf %42, %43 : vector<64x128xf32>
    %45 = vector.extract_strided_slice %44 {offsets = [0, 0], sizes = [8, 128], strides = [1, 1]} : vector<64x128xf32> to vector<8x128xf32>
    %46 = math.tanh %45 : vector<8x128xf32>
    %47 = vector.extract_strided_slice %44 {offsets = [8, 0], sizes = [8, 128], strides = [1, 1]} : vector<64x128xf32> to vector<8x128xf32>
    %cst_22 = arith.constant dense<0.000000e+00> : vector<8x128xf32>
    %48 = tpu.matmul %46, %40, %cst_22 {dimension_numbers = #tpu.dot_dimension_numbers<[1], [0], [0], [1], [0, 0, 1, 1], [], []>} : vector<8x128xf32>, vector<128x128xf32>, vector<8x128xf32> -> vector<8x128xf32>
    %49 = arith.addf %48, %47 : vector<8x128xf32>
    %50 = math.tanh %49 : vector<8x128xf32>
    %51 = vector.extract_strided_slice %44 {offsets = [16, 0], sizes = [8, 128], strides = [1, 1]} : vector<64x128xf32> to vector<8x128xf32>
    %cst_23 = arith.constant dense<0.000000e+00> : vector<8x128xf32>
    %52 = tpu.matmul %50, %40, %cst_23 {dimension_numbers = #tpu.dot_dimension_numbers<[1], [0], [0], [1], [0, 0, 1, 1], [], []>} : vector<8x128xf32>, vector<128x128xf32>, vector<8x128xf32> -> vector<8x128xf32>
    %53 = arith.addf %52, %51 : vector<8x128xf32>
    %54 = math.tanh %53 : vector<8x128xf32>
    %55 = vector.extract_strided_slice %44 {offsets = [24, 0], sizes = [8, 128], strides = [1, 1]} : vector<64x128xf32> to vector<8x128xf32>
    %cst_24 = arith.constant dense<0.000000e+00> : vector<8x128xf32>
    %56 = tpu.matmul %54, %40, %cst_24 {dimension_numbers = #tpu.dot_dimension_numbers<[1], [0], [0], [1], [0, 0, 1, 1], [], []>} : vector<8x128xf32>, vector<128x128xf32>, vector<8x128xf32> -> vector<8x128xf32>
    %57 = arith.addf %56, %55 : vector<8x128xf32>
    %58 = math.tanh %57 : vector<8x128xf32>
    %59 = vector.extract_strided_slice %44 {offsets = [32, 0], sizes = [8, 128], strides = [1, 1]} : vector<64x128xf32> to vector<8x128xf32>
    %cst_25 = arith.constant dense<0.000000e+00> : vector<8x128xf32>
    %60 = tpu.matmul %58, %40, %cst_25 {dimension_numbers = #tpu.dot_dimension_numbers<[1], [0], [0], [1], [0, 0, 1, 1], [], []>} : vector<8x128xf32>, vector<128x128xf32>, vector<8x128xf32> -> vector<8x128xf32>
    %61 = arith.addf %60, %59 : vector<8x128xf32>
    %62 = math.tanh %61 : vector<8x128xf32>
    %63 = vector.extract_strided_slice %44 {offsets = [40, 0], sizes = [8, 128], strides = [1, 1]} : vector<64x128xf32> to vector<8x128xf32>
    %cst_26 = arith.constant dense<0.000000e+00> : vector<8x128xf32>
    %64 = tpu.matmul %62, %40, %cst_26 {dimension_numbers = #tpu.dot_dimension_numbers<[1], [0], [0], [1], [0, 0, 1, 1], [], []>} : vector<8x128xf32>, vector<128x128xf32>, vector<8x128xf32> -> vector<8x128xf32>
    %65 = arith.addf %64, %63 : vector<8x128xf32>
    %66 = math.tanh %65 : vector<8x128xf32>
    %67 = vector.extract_strided_slice %44 {offsets = [48, 0], sizes = [8, 128], strides = [1, 1]} : vector<64x128xf32> to vector<8x128xf32>
    %cst_27 = arith.constant dense<0.000000e+00> : vector<8x128xf32>
    %68 = tpu.matmul %66, %40, %cst_27 {dimension_numbers = #tpu.dot_dimension_numbers<[1], [0], [0], [1], [0, 0, 1, 1], [], []>} : vector<8x128xf32>, vector<128x128xf32>, vector<8x128xf32> -> vector<8x128xf32>
    %69 = arith.addf %68, %67 : vector<8x128xf32>
    %70 = math.tanh %69 : vector<8x128xf32>
    %71 = vector.extract_strided_slice %44 {offsets = [56, 0], sizes = [8, 128], strides = [1, 1]} : vector<64x128xf32> to vector<8x128xf32>
    %cst_28 = arith.constant dense<0.000000e+00> : vector<8x128xf32>
    %72 = tpu.matmul %70, %40, %cst_28 {dimension_numbers = #tpu.dot_dimension_numbers<[1], [0], [0], [1], [0, 0, 1, 1], [], []>} : vector<8x128xf32>, vector<128x128xf32>, vector<8x128xf32> -> vector<8x128xf32>
    %73 = arith.addf %72, %71 : vector<8x128xf32>
    %74 = math.tanh %73 : vector<8x128xf32>
    %c0_29 = arith.constant 0 : index
    %c0_30 = arith.constant 0 : index
    %75 = vector.load %arg8[%c0_29, %c0_30] : memref<128x128xf32, #tpu.memory_space<vmem>>, vector<128x128xf32>
    %cst_31 = arith.constant dense<0.000000e+00> : vector<8x128xf32>
    %76 = tpu.matmul %74, %75, %cst_31 {dimension_numbers = #tpu.dot_dimension_numbers<[1], [0], [0], [1], [0, 0, 1, 1], [], []>} : vector<8x128xf32>, vector<128x128xf32>, vector<8x128xf32> -> vector<8x128xf32>
    %c0_32 = arith.constant 0 : index
    %c0_33 = arith.constant 0 : index
    %77 = vector.load %arg9[%c0_32, %c0_33] : memref<1x128xf32, #tpu.memory_space<vmem>>, vector<1x128xf32>
    %78 = vector.broadcast %77 : vector<1x128xf32> to vector<8x128xf32>
    %79 = arith.addf %76, %78 : vector<8x128xf32>
    %c0_34 = arith.constant 0 : index
    %c0_35 = arith.constant 0 : index
    %80 = vector.load %arg10[%c0_34, %c0_35] : memref<8x128xf32, #tpu.memory_space<vmem>>, vector<8x128xf32>
    tpu.vector_store %arg10[%c0_34, %c0_35], %79 {strides = array<i32>} : memref<8x128xf32, #tpu.memory_space<vmem>>, vector<8x128xf32>,
    return
  }
  func.func @transform_0(%arg0: i32) -> (i32, i32, i32) {
    %c0_i32 = arith.constant 0 : i32
    %c0_i32_0 = arith.constant 0 : i32
    %c0_i32_1 = arith.constant 0 : i32
    %c0_i32_2 = arith.constant 0 : i32
    return %c0_i32, %c0_i32_0, %c0_i32_1 : i32, i32, i32
  }
  func.func @transform_1(%arg0: i32) -> (i32, i32) {
    %c0_i32 = arith.constant 0 : i32
    %c0_i32_0 = arith.constant 0 : i32
    %c0_i32_1 = arith.constant 0 : i32
    return %c0_i32, %c0_i32_0 : i32, i32
  }
  func.func @transform_2(%arg0: i32) -> (i32, i32) {
    %c0_i32 = arith.constant 0 : i32
    %c0_i32_0 = arith.constant 0 : i32
    %c0_i32_1 = arith.constant 0 : i32
    return %c0_i32, %c0_i32_0 : i32, i32
  }
  func.func @transform_3(%arg0: i32) -> (i32, i32) {
    %c0_i32 = arith.constant 0 : i32
    %c0_i32_0 = arith.constant 0 : i32
    %c0_i32_1 = arith.constant 0 : i32
    return %c0_i32, %c0_i32_0 : i32, i32
  }
  func.func @transform_4(%arg0: i32) -> (i32, i32) {
    %c0_i32 = arith.constant 0 : i32
    %c0_i32_0 = arith.constant 0 : i32
    %c0_i32_1 = arith.constant 0 : i32
    return %c0_i32, %c0_i32_0 : i32, i32
  }
  func.func @transform_5(%arg0: i32) -> (i32, i32) {
    %c0_i32 = arith.constant 0 : i32
    %c0_i32_0 = arith.constant 0 : i32
    %c0_i32_1 = arith.constant 0 : i32
    return %c0_i32, %c0_i32_0 : i32, i32
  }
  func.func @transform_6(%arg0: i32) -> (i32, i32) {
    %c0_i32 = arith.constant 0 : i32
    %c0_i32_0 = arith.constant 0 : i32
    %c0_i32_1 = arith.constant 0 : i32
    return %c0_i32, %c0_i32_0 : i32, i32
  }
  func.func @transform_7(%arg0: i32) -> (i32, i32) {
    %c0_i32 = arith.constant 0 : i32
    %c0_i32_0 = arith.constant 0 : i32
    %c0_i32_1 = arith.constant 0 : i32
    return %c0_i32, %c0_i32_0 : i32, i32
  }
  func.func @transform_8(%arg0: i32) -> (i32, i32) {
    %c0_i32 = arith.constant 0 : i32
    %c0_i32_0 = arith.constant 0 : i32
    %c0_i32_1 = arith.constant 0 : i32
    return %c0_i32, %c0_i32_0 : i32, i32
  }
  func.func @transform_9(%arg0: i32) -> (i32, i32) {
    %c0_i32 = arith.constant 0 : i32
    %c0_i32_0 = arith.constant 0 : i32
    %c0_i32_1 = arith.constant 0 : i32
    return %c0_i32, %c0_i32_0 : i32, i32
  }
}

</mosaic_0001>

<llo_original>
// kernel: tpu_custom_call.1
$region0: #{tpu_custom_call.1}
  #allocation0 [shape = 'u32[]', space=smem, size = 0x4, offset = 0x4, fixed_abs, tag = 'smem constant byte address 0x4 - core index']
  #allocation1 [shape = 'u32[144,128]{1,0:T(1,128)}', space=vmem, size = 0x12000, scoped, tag = 'internal scratch']
  %s0 = inlined_call_operand.hbm [shape: f32[8,8,128], index: 0, kind: input, shape index: {}]
  %s1 = inlined_call_operand.hbm [shape: f32[128,128], index: 1, kind: input, shape index: {}]
  %s2 = inlined_call_operand.hbm [shape: f32[128,128], index: 2, kind: input, shape index: {}]
  %s3 = inlined_call_operand.vmem [shape: f32[1,128], index: 3, kind: input, shape index: {}]
  %s4 = inlined_call_operand.hbm [shape: f32[128,128], index: 4, kind: input, shape index: {}]
  %s5 = inlined_call_operand.hbm [shape: f32[128,128], index: 5, kind: input, shape index: {}]
  %s6 = inlined_call_operand.vmem [shape: f32[1,128], index: 6, kind: input, shape index: {}]
  %s7 = inlined_call_operand.hbm [shape: f32[128,128], index: 7, kind: input, shape index: {}]
  %s8 = inlined_call_operand.vmem [shape: f32[1,128], index: 8, kind: input, shape index: {}]
  %s9 = inlined_call_operand.hbm [shape: f32[8,128], index: 9, kind: output, shape index: {}]
  %s10 = sld [smem:[#allocation0]]
  $region70: #{tpu_custom_call.1} parent=0
    _
  %s12 = ssub.s32 1, %s10
  %s13 = scalar_select 0, %s12, %s10
  $region1: #{tpu_custom_call.1} parent=0
    #allocation2 [shape = 'u8[32768]{0}', space=vmem, size = 0x8000, scoped, tag = 'input window, operand 0, single buffered']
    #allocation3 [shape = 's32[1]{0}', space=sflag, size = 0x4, scoped, tag = 'scoped memory for tpu_custom_call.1']
    #allocation4 [shape = 's32[1]{0}', space=sflag, size = 0x4, scoped, tag = 'scoped memory for tpu_custom_call.1']
    #allocation5 [shape = 'u8[65536]{0}', space=vmem, size = 0x10000, scoped, tag = 'input window, operand 1, single buffered']
    #allocation6 [shape = 's32[1]{0}', space=sflag, size = 0x4, scoped, tag = 'scoped memory for tpu_custom_call.1']
    #allocation7 [shape = 'u8[65536]{0}', space=vmem, size = 0x10000, scoped, tag = 'input window, operand 2, single buffered']
    #allocation8 [shape = 'u8[65536]{0}', space=vmem, size = 0x10000, scoped, tag = 'input window, operand 4, single buffered']
    #allocation9 [shape = 's32[1]{0}', space=sflag, size = 0x4, scoped, tag = 'scoped memory for tpu_custom_call.1']
    #allocation10 [shape = 'u8[65536]{0}', space=vmem, size = 0x10000, scoped, tag = 'input window, operand 5, single buffered']
    #allocation11 [shape = 'u8[65536]{0}', space=vmem, size = 0x10000, scoped, tag = 'input window, operand 7, single buffered']
    #allocation12 [shape = 's32[1]{0}', space=sflag, size = 0x4, scoped, tag = 'scoped memory for tpu_custom_call.1']
    #allocation13 [shape = 'u8[4096]{0}', space=vmem, size = 0x1000, scoped, tag = 'output window, operand 0, single buffered']
    %14 = vsyncpa [#allocation3], 0
    %15 = vsyncpa [#allocation6], 0
    %16 = vsyncpa [#allocation9], 0
    %17 = vsyncpa [#allocation12], 0
    %18 = vsyncpa [#allocation4], 0
    // Predicated region
    $region2: #{tpu_custom_call.1} parent=1 // pred_check
      _
    $region3: #{tpu_custom_call.1} parent=1 // pred_check_branch
      %20 = sbr.rel (0) target = $region5
    $region4: #{tpu_custom_call.1} parent=1 // pred_region
      %s22 = ssub.s32 1024, 1024
      %23 = vsyncadd [#allocation3], %s22
      %s24 = sshll.u32 [#allocation2], 4
      %s25 = int_to_ptr.vmem [resolvable:$true] %s24
      %30 = dma.hbm_to_vmem [thread:$0]  %s0, 1024, %s25, [#allocation3], 128, 128, 8
    $region5: #{tpu_custom_call.1} parent=1 // pred_fallthru
      _
    // Predicated region
    $region6: #{tpu_custom_call.1} parent=1 // pred_check
      _
    $region7: #{tpu_custom_call.1} parent=1 // pred_check_branch
      %32 = sbr.rel (0) target = $region9
    $region8: #{tpu_custom_call.1} parent=1 // pred_region
      %s34 = ssub.s32 2048, 2048
      %35 = vsyncadd [#allocation6], %s34
      %s36 = sshll.u32 [#allocation5], 4
      %s37 = int_to_ptr.vmem [resolvable:$true] %s36
      %42 = dma.hbm_to_vmem [thread:$0]  %s1, 2048, %s37, [#allocation6], 128, 128, 8
    $region9: #{tpu_custom_call.1} parent=1 // pred_fallthru
      _
    // Predicated region
    $region10: #{tpu_custom_call.1} parent=1 // pred_check
      _
    $region11: #{tpu_custom_call.1} parent=1 // pred_check_branch
      %44 = sbr.rel (0) target = $region13
    $region12: #{tpu_custom_call.1} parent=1 // pred_region
      %s46 = ssub.s32 2048, 2048
      %47 = vsyncadd [#allocation6], %s46
      %s48 = sshll.u32 [#allocation7], 4
      %s49 = int_to_ptr.vmem [resolvable:$true] %s48
      %54 = dma.hbm_to_vmem [thread:$0]  %s2, 2048, %s49, [#allocation6], 128, 128, 8
    $region13: #{tpu_custom_call.1} parent=1 // pred_fallthru
      _
    // Predicated region
    $region14: #{tpu_custom_call.1} parent=1 // pred_check
      _
    $region15: #{tpu_custom_call.1} parent=1 // pred_check_branch
      %56 = sbr.rel (0) target = $region17
    $region16: #{tpu_custom_call.1} parent=1 // pred_region
      _
    $region17: #{tpu_custom_call.1} parent=1 // pred_fallthru
      _
    // Predicated region
    $region18: #{tpu_custom_call.1} parent=1 // pred_check
      _
    $region19: #{tpu_custom_call.1} parent=1 // pred_check_branch
      %58 = sbr.rel (0) target = $region21
    $region20: #{tpu_custom_call.1} parent=1 // pred_region
      %s60 = ssub.s32 2048, 2048
      %61 = vsyncadd [#allocation9], %s60
      %s62 = sshll.u32 [#allocation8], 4
      %s63 = int_to_ptr.vmem [resolvable:$true] %s62
      %68 = dma.hbm_to_vmem [thread:$0]  %s4, 2048, %s63, [#allocation9], 128, 128, 8
    $region21: #{tpu_custom_call.1} parent=1 // pred_fallthru
      _
    // Predicated region
    $region22: #{tpu_custom_call.1} parent=1 // pred_check
      _
    $region23: #{tpu_custom_call.1} parent=1 // pred_check_branch
      %70 = sbr.rel (0) target = $region25
    $region24: #{tpu_custom_call.1} parent=1 // pred_region
      %s72 = ssub.s32 2048, 2048
      %73 = vsyncadd [#allocation9], %s72
      %s74 = sshll.u32 [#allocation10], 4
      %s75 = int_to_ptr.vmem [resolvable:$true] %s74
      %80 = dma.hbm_to_vmem [thread:$0]  %s5, 2048, %s75, [#allocation9], 128, 128, 8
    $region25: #{tpu_custom_call.1} parent=1 // pred_fallthru
      _
    // Predicated region
    $region26: #{tpu_custom_call.1} parent=1 // pred_check
      _
    $region27: #{tpu_custom_call.1} parent=1 // pred_check_branch
      %82 = sbr.rel (0) target = $region29
    $region28: #{tpu_custom_call.1} parent=1 // pred_region
      _
    $region29: #{tpu_custom_call.1} parent=1 // pred_fallthru
      _
    // Predicated region
    $region30: #{tpu_custom_call.1} parent=1 // pred_check
      _
    $region31: #{tpu_custom_call.1} parent=1 // pred_check_branch
      %84 = sbr.rel (0) target = $region33
    $region32: #{tpu_custom_call.1} parent=1 // pred_region
      %s86 = ssub.s32 2048, 2048
      %87 = vsyncadd [#allocation12], %s86
      %s88 = sshll.u32 [#allocation11], 4
      %s89 = int_to_ptr.vmem [resolvable:$true] %s88
      %94 = dma.hbm_to_vmem [thread:$0]  %s7, 2048, %s89, [#allocation12], 128, 128, 8
    $region33: #{tpu_custom_call.1} parent=1 // pred_fallthru
      _
    // Predicated region
    $region34: #{tpu_custom_call.1} parent=1 // pred_check
      _
    $region35: #{tpu_custom_call.1} parent=1 // pred_check_branch
      %96 = sbr.rel (0) target = $region37
    $region36: #{tpu_custom_call.1} parent=1 // pred_region
      _
    $region37: #{tpu_custom_call.1} parent=1 // pred_fallthru
      _
    // Predicated region
    $region38: #{tpu_custom_call.1} parent=1 // pred_check
      _
    $region39: #{tpu_custom_call.1} parent=1 // pred_check_branch
      %98 = sbr.rel (0) target = $region41
    $region40: #{tpu_custom_call.1} parent=1 // pred_region
      %99 = dma.done [#allocation3], 1024
    $region41: #{tpu_custom_call.1} parent=1 // pred_fallthru
      _
    // Predicated region
    $region42: #{tpu_custom_call.1} parent=1 // pred_check
      _
    $region43: #{tpu_custom_call.1} parent=1 // pred_check_branch
      %101 = sbr.rel (0) target = $region45
    $region44: #{tpu_custom_call.1} parent=1 // pred_region
      %102 = dma.done [#allocation6], 2048
    $region45: #{tpu_custom_call.1} parent=1 // pred_fallthru
      _
    // Predicated region
    $region46: #{tpu_custom_call.1} parent=1 // pred_check
      _
    $region47: #{tpu_custom_call.1} parent=1 // pred_check_branch
      %104 = sbr.rel (0) target = $region49
    $region48: #{tpu_custom_call.1} parent=1 // pred_region
      %105 = dma.done [#allocation6], 2048
    $region49: #{tpu_custom_call.1} parent=1 // pred_fallthru
      _
    // Predicated region
    $region50: #{tpu_custom_call.1} parent=1 // pred_check
      _
    $region51: #{tpu_custom_call.1} parent=1 // pred_check_branch
      %107 = sbr.rel (0) target = $region53
    $region52: #{tpu_custom_call.1} parent=1 // pred_region
      %108 = dma.done [#allocation9], 2048
    $region53: #{tpu_custom_call.1} parent=1 // pred_fallthru
      _
    // Predicated region
    $region54: #{tpu_custom_call.1} parent=1 // pred_check
      _
    $region55: #{tpu_custom_call.1} parent=1 // pred_check_branch
      %110 = sbr.rel (0) target = $region57
    $region56: #{tpu_custom_call.1} parent=1 // pred_region
      %111 = dma.done [#allocation9], 2048
    $region57: #{tpu_custom_call.1} parent=1 // pred_fallthru
      _
    // Predicated region
    $region58: #{tpu_custom_call.1} parent=1 // pred_check
      _
    $region59: #{tpu_custom_call.1} parent=1 // pred_check_branch
      %113 = sbr.rel (0) target = $region61
    $region60: #{tpu_custom_call.1} parent=1 // pred_region
      %114 = dma.done [#allocation12], 2048
    $region61: #{tpu_custom_call.1} parent=1 // pred_fallthru
      _
    %v115 = vld [vmem:[#allocation2] sm:$0xff]
    %v116 = vld [vmem:[#allocation2 + $0x8] sm:$0xff]
    %v117 = vld [vmem:[#allocation2 + $0x10] sm:$0xff]
    %v118 = vld [vmem:[#allocation2 + $0x18] sm:$0xff]
    %v119 = vld [vmem:[#allocation2 + $0x20] sm:$0xff]
    %v120 = vld [vmem:[#allocation2 + $0x28] sm:$0xff]
    %v121 = vld [vmem:[#allocation2 + $0x30] sm:$0xff]
    %v122 = vld [vmem:[#allocation2 + $0x38] sm:$0xff]
    %v123 = vld [vmem:[#allocation5] sm:$0xff]
    %v124 = vld [vmem:[#allocation5 + $0x8] sm:$0xff]
    %v125 = vld [vmem:[#allocation5 + $0x10] sm:$0xff]
    %v126 = vld [vmem:[#allocation5 + $0x18] sm:$0xff]
    %v127 = vld [vmem:[#allocation5 + $0x20] sm:$0xff]
    %v128 = vld [vmem:[#allocation5 + $0x28] sm:$0xff]
    %v129 = vld [vmem:[#allocation5 + $0x30] sm:$0xff]
    %v130 = vld [vmem:[#allocation5 + $0x38] sm:$0xff]
    %v131 = vld [vmem:[#allocation5 + $0x40] sm:$0xff]
    %v132 = vld [vmem:[#allocation5 + $0x48] sm:$0xff]
    %v133 = vld [vmem:[#allocation5 + $0x50] sm:$0xff]
    %v134 = vld [vmem:[#allocation5 + $0x58] sm:$0xff]
    %v135 = vld [vmem:[#allocation5 + $0x60] sm:$0xff]
    %v136 = vld [vmem:[#allocation5 + $0x68] sm:$0xff]
    %v137 = vld [vmem:[#allocation5 + $0x70] sm:$0xff]
    %v138 = vld [vmem:[#allocation5 + $0x78] sm:$0xff]
    %v139 = vld [vmem:[#allocation7] sm:$0xff]
    %v140 = vld [vmem:[#allocation7 + $0x8] sm:$0xff]
    %v141 = vld [vmem:[#allocation7 + $0x10] sm:$0xff]
    %v142 = vld [vmem:[#allocation7 + $0x18] sm:$0xff]
    %v143 = vld [vmem:[#allocation7 + $0x20] sm:$0xff]
    %v144 = vld [vmem:[#allocation7 + $0x28] sm:$0xff]
    %v145 = vld [vmem:[#allocation7 + $0x30] sm:$0xff]
    %v146 = vld [vmem:[#allocation7 + $0x38] sm:$0xff]
    %v147 = vld [vmem:[#allocation7 + $0x40] sm:$0xff]
    %v148 = vld [vmem:[#allocation7 + $0x48] sm:$0xff]
    %v149 = vld [vmem:[#allocation7 + $0x50] sm:$0xff]
    %v150 = vld [vmem:[#allocation7 + $0x58] sm:$0xff]
    %v151 = vld [vmem:[#allocation7 + $0x60] sm:$0xff]
    %v152 = vld [vmem:[#allocation7 + $0x68] sm:$0xff]
    %v153 = vld [vmem:[#allocation7 + $0x70] sm:$0xff]
    %v154 = vld [vmem:[#allocation7 + $0x78] sm:$0xff]
    %v155 = vld [vmem:[%s3] sm:$0x1]
    %v157 = vlaneseq
    %v158 = vshrl.u32 %v157, 7
    %v159 = vsub.s32 0, %v158
    %v160 = vrot.slane %v155, %v159
    %162 = vmatprep.subr.mxu0 0.0
    %163 = vmatpush1.msra.mxu0 %v123
    %164 = vmatprep.subr.mxu0 0.0
    %165 = vmatpush1.msra.mxu0 %v124
    %166 = vmatprep.subr.mxu0 0.0
    %167 = vmatpush1.msra.mxu0 %v125
    %168 = vmatprep.subr.mxu0 0.0
    %169 = vmatpush1.msra.mxu0 %v126
    %170 = vmatprep.subr.mxu0 0.0
    %171 = vmatpush1.msra.mxu0 %v127
    %172 = vmatprep.subr.mxu0 0.0
    %173 = vmatpush1.msra.mxu0 %v128
    %174 = vmatprep.subr.mxu0 0.0
    %175 = vmatpush1.msra.mxu0 %v129
    %176 = vmatprep.subr.mxu0 0.0
    %177 = vmatpush1.msra.mxu0 %v130
    %178 = vmatprep.subr.mxu0 0.0
    %179 = vmatpush1.msra.mxu0 %v131
    %180 = vmatprep.subr.mxu0 0.0
    %181 = vmatpush1.msra.mxu0 %v132
    %182 = vmatprep.subr.mxu0 0.0
    %183 = vmatpush1.msra.mxu0 %v133
    %184 = vmatprep.subr.mxu0 0.0
    %185 = vmatpush1.msra.mxu0 %v134
    %186 = vmatprep.subr.mxu0 0.0
    %187 = vmatpush1.msra.mxu0 %v135
    %188 = vmatprep.subr.mxu0 0.0
    %189 = vmatpush1.msra.mxu0 %v136
    %190 = vmatprep.subr.mxu0 0.0
    %191 = vmatpush1.msra.mxu0 %v137
    %192 = vmatprep.subr.mxu0 0.0
    %193 = vmatpush1.msra.mxu0 %v138
    %194 = vmatprep.subr.mxu0 0.0
    %195 = vmatpush1.msra.mxu0 0.0
    %196 = vmatprep.subr.mxu0 0.0
    %197 = vmatpush1.msra.mxu0 0.0
    %198 = vmatprep.subr.mxu0 0.0
    %199 = vmatpush1.msra.mxu0 0.0
    %200 = vmatprep.subr.mxu0 0.0
    %201 = vmatpush1.msra.mxu0 0.0
    %202 = vmatprep.subr.mxu0 0.0
    %203 = vmatpush1.msra.mxu0 0.0
    %204 = vmatprep.subr.mxu0 0.0
    %205 = vmatpush1.msra.mxu0 0.0
    %206 = vmatprep.subr.mxu0 0.0
    %207 = vmatpush1.msra.mxu0 0.0
    %208 = vmatprep.subr.mxu0 0.0
    %209 = vmatpush1.msra.mxu0 0.0
    %210 = vmatprep.subr.mxu0 0.0
    %211 = vmatpush1.msra.mxu0 0.0
    %212 = vmatprep.subr.mxu0 0.0
    %213 = vmatpush1.msra.mxu0 0.0
    %214 = vmatprep.subr.mxu0 0.0
    %215 = vmatpush1.msra.mxu0 0.0
    %216 = vmatprep.subr.mxu0 0.0
    %217 = vmatpush1.msra.mxu0 0.0
    %218 = vmatprep.subr.mxu0 0.0
    %219 = vmatpush1.msra.mxu0 0.0
    %220 = vmatprep.subr.mxu0 0.0
    %221 = vmatpush1.msra.mxu0 0.0
    %222 = vmatprep.subr.mxu0 0.0
    %223 = vmatpush1.msra.mxu0 0.0
    %224 = vmatprep.subr.mxu0 0.0
    %225 = vmatpush1.msra.mxu0 0.0
    %226 = vmatprep.mubr.f32.mxu0 0.0
    %227 = vmatmul.mubr.f32.gmra.mrb[0].mxu0 %v115
    %v228 = vpop.f32.mrb[0].mxu0
    %v229 = vadd.f32 %v160, %v228
    %v230 = vpop.f32.mrb[0].mxu0
    %231 = vmatprep.mubr.f32.mxu0 0.0
    %232 = vmatmul.mubr.f32.gmra.mrb[0].mxu0 %v116
    %v233 = vpop.f32.mrb[0].mxu0
    %v234 = vadd.f32 %v160, %v233
    %v235 = vpop.f32.mrb[0].mxu0
    %236 = vmatprep.mubr.f32.mxu0 0.0
    %237 = vmatmul.mubr.f32.gmra.mrb[0].mxu0 %v117
    %v238 = vpop.f32.mrb[0].mxu0
    %v239 = vadd.f32 %v160, %v238
    %v240 = vpop.f32.mrb[0].mxu0
    %241 = vmatprep.mubr.f32.mxu0 0.0
    %242 = vmatmul.mubr.f32.gmra.mrb[0].mxu0 %v118
    %v243 = vpop.f32.mrb[0].mxu0
    %v244 = vadd.f32 %v160, %v243
    %v245 = vpop.f32.mrb[0].mxu0
    %246 = vmatprep.mubr.f32.mxu0 0.0
    %247 = vmatmul.mubr.f32.gmra.mrb[0].mxu0 %v119
    %v248 = vpop.f32.mrb[0].mxu0
    %v249 = vadd.f32 %v160, %v248
    %v250 = vpop.f32.mrb[0].mxu0
    %251 = vmatprep.mubr.f32.mxu0 0.0
    %252 = vmatmul.mubr.f32.gmra.mrb[0].mxu0 %v120
    %v253 = vpop.f32.mrb[0].mxu0
    %v254 = vadd.f32 %v160, %v253
    %v255 = vpop.f32.mrb[0].mxu0
    %256 = vmatprep.mubr.f32.mxu0 0.0
    %257 = vmatmul.mubr.f32.gmra.mrb[0].mxu0 %v121
    %v258 = vpop.f32.mrb[0].mxu0
    %v259 = vadd.f32 %v160, %v258
    %v260 = vpop.f32.mrb[0].mxu0
    %261 = vmatprep.mubr.f32.mxu0 0.0
    %262 = vmatmul.mubr.f32.gmra.mrb[0].mxu0 %v122
    %v263 = vpop.f32.mrb[0].mxu0
    %v264 = vadd.f32 %v160, %v263
    %v265 = vpop.f32.mrb[0].mxu0
    %266 = vdwg.mxu0
    %v267 = vtanh.pop %v229
    %268 = vmatprep.subr.mxu0 0.0
    %269 = vmatpush1.msra.mxu0 %v139
    %270 = vmatprep.subr.mxu0 0.0
    %271 = vmatpush1.msra.mxu0 %v140
    %272 = vmatprep.subr.mxu0 0.0
    %273 = vmatpush1.msra.mxu0 %v141
    %274 = vmatprep.subr.mxu0 0.0
    %275 = vmatpush1.msra.mxu0 %v142
    %276 = vmatprep.subr.mxu0 0.0
    %277 = vmatpush1.msra.mxu0 %v143
    %278 = vmatprep.subr.mxu0 0.0
    %279 = vmatpush1.msra.mxu0 %v144
    %280 = vmatprep.subr.mxu0 0.0
    %281 = vmatpush1.msra.mxu0 %v145
    %282 = vmatprep.subr.mxu0 0.0
    %283 = vmatpush1.msra.mxu0 %v146
    %284 = vmatprep.subr.mxu0 0.0
    %285 = vmatpush1.msra.mxu0 %v147
    %286 = vmatprep.subr.mxu0 0.0
    %287 = vmatpush1.msra.mxu0 %v148
    %288 = vmatprep.subr.mxu0 0.0
    %289 = vmatpush1.msra.mxu0 %v149
    %290 = vmatprep.subr.mxu0 0.0
    %291 = vmatpush1.msra.mxu0 %v150
    %292 = vmatprep.subr.mxu0 0.0
    %293 = vmatpush1.msra.mxu0 %v151
    %294 = vmatprep.subr.mxu0 0.0
    %295 = vmatpush1.msra.mxu0 %v152
    %296 = vmatprep.subr.mxu0 0.0
    %297 = vmatpush1.msra.mxu0 %v153
    %298 = vmatprep.subr.mxu0 0.0
    %299 = vmatpush1.msra.mxu0 %v154
    %300 = vmatprep.subr.mxu0 0.0
    %301 = vmatpush1.msra.mxu0 0.0
    %302 = vmatprep.subr.mxu0 0.0
    %303 = vmatpush1.msra.mxu0 0.0
    %304 = vmatprep.subr.mxu0 0.0
    %305 = vmatpush1.msra.mxu0 0.0
    %306 = vmatprep.subr.mxu0 0.0
    %307 = vmatpush1.msra.mxu0 0.0
    %308 = vmatprep.subr.mxu0 0.0
    %309 = vmatpush1.msra.mxu0 0.0
    %310 = vmatprep.subr.mxu0 0.0
    %311 = vmatpush1.msra.mxu0 0.0
    %312 = vmatprep.subr.mxu0 0.0
    %313 = vmatpush1.msra.mxu0 0.0
    %314 = vmatprep.subr.mxu0 0.0
    %315 = vmatpush1.msra.mxu0 0.0
    %316 = vmatprep.subr.mxu0 0.0
    %317 = vmatpush1.msra.mxu0 0.0
    %318 = vmatprep.subr.mxu0 0.0
    %319 = vmatpush1.msra.mxu0 0.0
    %320 = vmatprep.subr.mxu0 0.0
    %321 = vmatpush1.msra.mxu0 0.0
    %322 = vmatprep.subr.mxu0 0.0
    %323 = vmatpush1.msra.mxu0 0.0
    %324 = vmatprep.subr.mxu0 0.0
    %325 = vmatpush1.msra.mxu0 0.0
    %326 = vmatprep.subr.mxu0 0.0
    %327 = vmatpush1.msra.mxu0 0.0
    %328 = vmatprep.subr.mxu0 0.0
    %329 = vmatpush1.msra.mxu0 0.0
    %330 = vmatprep.subr.mxu0 0.0
    %331 = vmatpush1.msra.mxu0 0.0
    %332 = vmatprep.mubr.f32.mxu0 0.0
    %333 = vmatmul.mubr.f32.gmra.mrb[0].mxu0 %v267
    %v334 = vpop.f32.mrb[0].mxu0
    %v335 = vadd.f32 %v234, %v334
    %v336 = vpop.f32.mrb[0].mxu0
    %337 = vdwg.mxu0
    %v338 = vtanh.pop %v335
    %339 = vmatprep.subr.mxu0 0.0
    %340 = vmatpush1.msra.mxu0 %v139
    %341 = vmatprep.subr.mxu0 0.0
    %342 = vmatpush1.msra.mxu0 %v140
    %343 = vmatprep.subr.mxu0 0.0
    %344 = vmatpush1.msra.mxu0 %v141
    %345 = vmatprep.subr.mxu0 0.0
    %346 = vmatpush1.msra.mxu0 %v142
    %347 = vmatprep.subr.mxu0 0.0
    %348 = vmatpush1.msra.mxu0 %v143
    %349 = vmatprep.subr.mxu0 0.0
    %350 = vmatpush1.msra.mxu0 %v144
    %351 = vmatprep.subr.mxu0 0.0
    %352 = vmatpush1.msra.mxu0 %v145
    %353 = vmatprep.subr.mxu0 0.0
    %354 = vmatpush1.msra.mxu0 %v146
    %355 = vmatprep.subr.mxu0 0.0
    %356 = vmatpush1.msra.mxu0 %v147
    %357 = vmatprep.subr.mxu0 0.0
    %358 = vmatpush1.msra.mxu0 %v148
    %359 = vmatprep.subr.mxu0 0.0
    %360 = vmatpush1.msra.mxu0 %v149
    %361 = vmatprep.subr.mxu0 0.0
    %362 = vmatpush1.msra.mxu0 %v150
    %363 = vmatprep.subr.mxu0 0.0
    %364 = vmatpush1.msra.mxu0 %v151
    %365 = vmatprep.subr.mxu0 0.0
    %366 = vmatpush1.msra.mxu0 %v152
    %367 = vmatprep.subr.mxu0 0.0
    %368 = vmatpush1.msra.mxu0 %v153
    %369 = vmatprep.subr.mxu0 0.0
    %370 = vmatpush1.msra.mxu0 %v154
    %371 = vmatprep.subr.mxu0 0.0
    %372 = vmatpush1.msra.mxu0 0.0
    %373 = vmatprep.subr.mxu0 0.0
    %374 = vmatpush1.msra.mxu0 0.0
    %375 = vmatprep.subr.mxu0 0.0
    %376 = vmatpush1.msra.mxu0 0.0
    %377 = vmatprep.subr.mxu0 0.0
    %378 = vmatpush1.msra.mxu0 0.0
    %379 = vmatprep.subr.mxu0 0.0
    %380 = vmatpush1.msra.mxu0 0.0
    %381 = vmatprep.subr.mxu0 0.0
    %382 = vmatpush1.msra.mxu0 0.0
    %383 = vmatprep.subr.mxu0 0.0
    %384 = vmatpush1.msra.mxu0 0.0
    %385 = vmatprep.subr.mxu0 0.0
    %386 = vmatpush1.msra.mxu0 0.0
    %387 = vmatprep.subr.mxu0 0.0
    %388 = vmatpush1.msra.mxu0 0.0
    %389 = vmatprep.subr.mxu0 0.0
    %390 = vmatpush1.msra.mxu0 0.0
    %391 = vmatprep.subr.mxu0 0.0
    %392 = vmatpush1.msra.mxu0 0.0
    %393 = vmatprep.subr.mxu0 0.0
    %394 = vmatpush1.msra.mxu0 0.0
    %395 = vmatprep.subr.mxu0 0.0
    %396 = vmatpush1.msra.mxu0 0.0
    %397 = vmatprep.subr.mxu0 0.0
    %398 = vmatpush1.msra.mxu0 0.0
    %399 = vmatprep.subr.mxu0 0.0
    %400 = vmatpush1.msra.mxu0 0.0
    %401 = vmatprep.subr.mxu0 0.0
    %402 = vmatpush1.msra.mxu0 0.0
    %403 = vmatprep.mubr.f32.mxu0 0.0
    %404 = vmatmul.mubr.f32.gmra.mrb[0].mxu0 %v338
    %v405 = vpop.f32.mrb[0].mxu0
    %v406 = vadd.f32 %v239, %v405
    %v407 = vpop.f32.mrb[0].mxu0
    %408 = vdwg.mxu0
    %v409 = vtanh.pop %v406
    %410 = vmatprep.subr.mxu0 0.0
    %411 = vmatpush1.msra.mxu0 %v139
    %412 = vmatprep.subr.mxu0 0.0
    %413 = vmatpush1.msra.mxu0 %v140
    %414 = vmatprep.subr.mxu0 0.0
    %415 = vmatpush1.msra.mxu0 %v141
    %416 = vmatprep.subr.mxu0 0.0
    %417 = vmatpush1.msra.mxu0 %v142
    %418 = vmatprep.subr.mxu0 0.0
    %419 = vmatpush1.msra.mxu0 %v143
    %420 = vmatprep.subr.mxu0 0.0
    %421 = vmatpush1.msra.mxu0 %v144
    %422 = vmatprep.subr.mxu0 0.0
    %423 = vmatpush1.msra.mxu0 %v145
    %424 = vmatprep.subr.mxu0 0.0
    %425 = vmatpush1.msra.mxu0 %v146
    %426 = vmatprep.subr.mxu0 0.0
    %427 = vmatpush1.msra.mxu0 %v147
    %428 = vmatprep.subr.mxu0 0.0
    %429 = vmatpush1.msra.mxu0 %v148
    %430 = vmatprep.subr.mxu0 0.0
    %431 = vmatpush1.msra.mxu0 %v149
    %432 = vmatprep.subr.mxu0 0.0
    %433 = vmatpush1.msra.mxu0 %v150
    %434 = vmatprep.subr.mxu0 0.0
    %435 = vmatpush1.msra.mxu0 %v151
    %436 = vmatprep.subr.mxu0 0.0
    %437 = vmatpush1.msra.mxu0 %v152
    %438 = vmatprep.subr.mxu0 0.0
    %439 = vmatpush1.msra.mxu0 %v153
    %440 = vmatprep.subr.mxu0 0.0
    %441 = vmatpush1.msra.mxu0 %v154
    %442 = vmatprep.subr.mxu0 0.0
    %443 = vmatpush1.msra.mxu0 0.0
    %444 = vmatprep.subr.mxu0 0.0
    %445 = vmatpush1.msra.mxu0 0.0
    %446 = vmatprep.subr.mxu0 0.0
    %447 = vmatpush1.msra.mxu0 0.0
    %448 = vmatprep.subr.mxu0 0.0
    %449 = vmatpush1.msra.mxu0 0.0
    %450 = vmatprep.subr.mxu0 0.0
    %451 = vmatpush1.msra.mxu0 0.0
    %452 = vmatprep.subr.mxu0 0.0
    %453 = vmatpush1.msra.mxu0 0.0
    %454 = vmatprep.subr.mxu0 0.0
    %455 = vmatpush1.msra.mxu0 0.0
    %456 = vmatprep.subr.mxu0 0.0
    %457 = vmatpush1.msra.mxu0 0.0
    %458 = vmatprep.subr.mxu0 0.0
    %459 = vmatpush1.msra.mxu0 0.0
    %460 = vmatprep.subr.mxu0 0.0
    %461 = vmatpush1.msra.mxu0 0.0
    %462 = vmatprep.subr.mxu0 0.0
    %463 = vmatpush1.msra.mxu0 0.0
    %464 = vmatprep.subr.mxu0 0.0
    %465 = vmatpush1.msra.mxu0 0.0
    %466 = vmatprep.subr.mxu0 0.0
    %467 = vmatpush1.msra.mxu0 0.0
    %468 = vmatprep.subr.mxu0 0.0
    %469 = vmatpush1.msra.mxu0 0.0
    %470 = vmatprep.subr.mxu0 0.0
    %471 = vmatpush1.msra.mxu0 0.0
    %472 = vmatprep.subr.mxu0 0.0
    %473 = vmatpush1.msra.mxu0 0.0
    %474 = vmatprep.mubr.f32.mxu0 0.0
    %475 = vmatmul.mubr.f32.gmra.mrb[0].mxu0 %v409
    %v476 = vpop.f32.mrb[0].mxu0
    %v477 = vadd.f32 %v244, %v476
    %v478 = vpop.f32.mrb[0].mxu0
    %479 = vdwg.mxu0
    %v480 = vtanh.pop %v477
    %481 = vmatprep.subr.mxu0 0.0
    %482 = vmatpush1.msra.mxu0 %v139
    %483 = vmatprep.subr.mxu0 0.0
    %484 = vmatpush1.msra.mxu0 %v140
    %485 = vmatprep.subr.mxu0 0.0
    %486 = vmatpush1.msra.mxu0 %v141
    %487 = vmatprep.subr.mxu0 0.0
    %488 = vmatpush1.msra.mxu0 %v142
    %489 = vmatprep.subr.mxu0 0.0
    %490 = vmatpush1.msra.mxu0 %v143
    %491 = vmatprep.subr.mxu0 0.0
    %492 = vmatpush1.msra.mxu0 %v144
    %493 = vmatprep.subr.mxu0 0.0
    %494 = vmatpush1.msra.mxu0 %v145
    %495 = vmatprep.subr.mxu0 0.0
    %496 = vmatpush1.msra.mxu0 %v146
    %497 = vmatprep.subr.mxu0 0.0
    %498 = vmatpush1.msra.mxu0 %v147
    %499 = vmatprep.subr.mxu0 0.0
    %500 = vmatpush1.msra.mxu0 %v148
    %501 = vmatprep.subr.mxu0 0.0
    %502 = vmatpush1.msra.mxu0 %v149
    %503 = vmatprep.subr.mxu0 0.0
    %504 = vmatpush1.msra.mxu0 %v150
    %505 = vmatprep.subr.mxu0 0.0
    %506 = vmatpush1.msra.mxu0 %v151
    %507 = vmatprep.subr.mxu0 0.0
    %508 = vmatpush1.msra.mxu0 %v152
    %509 = vmatprep.subr.mxu0 0.0
    %510 = vmatpush1.msra.mxu0 %v153
    %511 = vmatprep.subr.mxu0 0.0
    %512 = vmatpush1.msra.mxu0 %v154
    %513 = vmatprep.subr.mxu0 0.0
    %514 = vmatpush1.msra.mxu0 0.0
    %515 = vmatprep.subr.mxu0 0.0
    %516 = vmatpush1.msra.mxu0 0.0
    %517 = vmatprep.subr.mxu0 0.0
    %518 = vmatpush1.msra.mxu0 0.0
    %519 = vmatprep.subr.mxu0 0.0
    %520 = vmatpush1.msra.mxu0 0.0
    %521 = vmatprep.subr.mxu0 0.0
    %522 = vmatpush1.msra.mxu0 0.0
    %523 = vmatprep.subr.mxu0 0.0
    %524 = vmatpush1.msra.mxu0 0.0
    %525 = vmatprep.subr.mxu0 0.0
    %526 = vmatpush1.msra.mxu0 0.0
    %527 = vmatprep.subr.mxu0 0.0
    %528 = vmatpush1.msra.mxu0 0.0
    %529 = vmatprep.subr.mxu0 0.0
    %530 = vmatpush1.msra.mxu0 0.0
    %531 = vmatprep.subr.mxu0 0.0
    %532 = vmatpush1.msra.mxu0 0.0
    %533 = vmatprep.subr.mxu0 0.0
    %534 = vmatpush1.msra.mxu0 0.0
    %535 = vmatprep.subr.mxu0 0.0
    %536 = vmatpush1.msra.mxu0 0.0
    %537 = vmatprep.subr.mxu0 0.0
    %538 = vmatpush1.msra.mxu0 0.0
    %539 = vmatprep.subr.mxu0 0.0
    %540 = vmatpush1.msra.mxu0 0.0
    %541 = vmatprep.subr.mxu0 0.0
    %542 = vmatpush1.msra.mxu0 0.0
    %543 = vmatprep.subr.mxu0 0.0
    %544 = vmatpush1.msra.mxu0 0.0
    %545 = vmatprep.mubr.f32.mxu0 0.0
    %546 = vmatmul.mubr.f32.gmra.mrb[0].mxu0 %v480
    %v547 = vpop.f32.mrb[0].mxu0
    %v548 = vadd.f32 %v249, %v547
    %v549 = vpop.f32.mrb[0].mxu0
    %550 = vdwg.mxu0
    %v551 = vtanh.pop %v548
    %552 = vmatprep.subr.mxu0 0.0
    %553 = vmatpush1.msra.mxu0 %v139
    %554 = vmatprep.subr.mxu0 0.0
    %555 = vmatpush1.msra.mxu0 %v140
    %556 = vmatprep.subr.mxu0 0.0
    %557 = vmatpush1.msra.mxu0 %v141
    %558 = vmatprep.subr.mxu0 0.0
    %559 = vmatpush1.msra.mxu0 %v142
    %560 = vmatprep.subr.mxu0 0.0
    %561 = vmatpush1.msra.mxu0 %v143
    %562 = vmatprep.subr.mxu0 0.0
    %563 = vmatpush1.msra.mxu0 %v144
    %564 = vmatprep.subr.mxu0 0.0
    %565 = vmatpush1.msra.mxu0 %v145
    %566 = vmatprep.subr.mxu0 0.0
    %567 = vmatpush1.msra.mxu0 %v146
    %568 = vmatprep.subr.mxu0 0.0
    %569 = vmatpush1.msra.mxu0 %v147
    %570 = vmatprep.subr.mxu0 0.0
    %571 = vmatpush1.msra.mxu0 %v148
    %572 = vmatprep.subr.mxu0 0.0
    %573 = vmatpush1.msra.mxu0 %v149
    %574 = vmatprep.subr.mxu0 0.0
    %575 = vmatpush1.msra.mxu0 %v150
    %576 = vmatprep.subr.mxu0 0.0
    %577 = vmatpush1.msra.mxu0 %v151
    %578 = vmatprep.subr.mxu0 0.0
    %579 = vmatpush1.msra.mxu0 %v152
    %580 = vmatprep.subr.mxu0 0.0
    %581 = vmatpush1.msra.mxu0 %v153
    %582 = vmatprep.subr.mxu0 0.0
    %583 = vmatpush1.msra.mxu0 %v154
    %584 = vmatprep.subr.mxu0 0.0
    %585 = vmatpush1.msra.mxu0 0.0
    %586 = vmatprep.subr.mxu0 0.0
    %587 = vmatpush1.msra.mxu0 0.0
    %588 = vmatprep.subr.mxu0 0.0
    %589 = vmatpush1.msra.mxu0 0.0
    %590 = vmatprep.subr.mxu0 0.0
    %591 = vmatpush1.msra.mxu0 0.0
    %592 = vmatprep.subr.mxu0 0.0
    %593 = vmatpush1.msra.mxu0 0.0
    %594 = vmatprep.subr.mxu0 0.0
    %595 = vmatpush1.msra.mxu0 0.0
    %596 = vmatprep.subr.mxu0 0.0
    %597 = vmatpush1.msra.mxu0 0.0
    %598 = vmatprep.subr.mxu0 0.0
    %599 = vmatpush1.msra.mxu0 0.0
    %600 = vmatprep.subr.mxu0 0.0
    %601 = vmatpush1.msra.mxu0 0.0
    %602 = vmatprep.subr.mxu0 0.0
    %603 = vmatpush1.msra.mxu0 0.0
    %604 = vmatprep.subr.mxu0 0.0
    %605 = vmatpush1.msra.mxu0 0.0
    %606 = vmatprep.subr.mxu0 0.0
    %607 = vmatpush1.msra.mxu0 0.0
    %608 = vmatprep.subr.mxu0 0.0
    %609 = vmatpush1.msra.mxu0 0.0
    %610 = vmatprep.subr.mxu0 0.0
    %611 = vmatpush1.msra.mxu0 0.0
    %612 = vmatprep.subr.mxu0 0.0
    %613 = vmatpush1.msra.mxu0 0.0
    %614 = vmatprep.subr.mxu0 0.0
    %615 = vmatpush1.msra.mxu0 0.0
    %616 = vmatprep.mubr.f32.mxu0 0.0
    %617 = vmatmul.mubr.f32.gmra.mrb[0].mxu0 %v551
    %v618 = vpop.f32.mrb[0].mxu0
    %v619 = vadd.f32 %v254, %v618
    %v620 = vpop.f32.mrb[0].mxu0
    %621 = vdwg.mxu0
    %v622 = vtanh.pop %v619
    %623 = vmatprep.subr.mxu0 0.0
    %624 = vmatpush1.msra.mxu0 %v139
    %625 = vmatprep.subr.mxu0 0.0
    %626 = vmatpush1.msra.mxu0 %v140
    %627 = vmatprep.subr.mxu0 0.0
    %628 = vmatpush1.msra.mxu0 %v141
    %629 = vmatprep.subr.mxu0 0.0
    %630 = vmatpush1.msra.mxu0 %v142
    %631 = vmatprep.subr.mxu0 0.0
    %632 = vmatpush1.msra.mxu0 %v143
    %633 = vmatprep.subr.mxu0 0.0
    %634 = vmatpush1.msra.mxu0 %v144
    %635 = vmatprep.subr.mxu0 0.0
    %636 = vmatpush1.msra.mxu0 %v145
    %637 = vmatprep.subr.mxu0 0.0
    %638 = vmatpush1.msra.mxu0 %v146
    %639 = vmatprep.subr.mxu0 0.0
    %640 = vmatpush1.msra.mxu0 %v147
    %641 = vmatprep.subr.mxu0 0.0
    %642 = vmatpush1.msra.mxu0 %v148
    %643 = vmatprep.subr.mxu0 0.0
    %644 = vmatpush1.msra.mxu0 %v149
    %645 = vmatprep.subr.mxu0 0.0
    %646 = vmatpush1.msra.mxu0 %v150
    %647 = vmatprep.subr.mxu0 0.0
    %648 = vmatpush1.msra.mxu0 %v151
    %649 = vmatprep.subr.mxu0 0.0
    %650 = vmatpush1.msra.mxu0 %v152
    %651 = vmatprep.subr.mxu0 0.0
    %652 = vmatpush1.msra.mxu0 %v153
    %653 = vmatprep.subr.mxu0 0.0
    %654 = vmatpush1.msra.mxu0 %v154
    %655 = vmatprep.subr.mxu0 0.0
    %656 = vmatpush1.msra.mxu0 0.0
    %657 = vmatprep.subr.mxu0 0.0
    %658 = vmatpush1.msra.mxu0 0.0
    %659 = vmatprep.subr.mxu0 0.0
    %660 = vmatpush1.msra.mxu0 0.0
    %661 = vmatprep.subr.mxu0 0.0
    %662 = vmatpush1.msra.mxu0 0.0
    %663 = vmatprep.subr.mxu0 0.0
    %664 = vmatpush1.msra.mxu0 0.0
    %665 = vmatprep.subr.mxu0 0.0
    %666 = vmatpush1.msra.mxu0 0.0
    %667 = vmatprep.subr.mxu0 0.0
    %668 = vmatpush1.msra.mxu0 0.0
    %669 = vmatprep.subr.mxu0 0.0
    %670 = vmatpush1.msra.mxu0 0.0
    %671 = vmatprep.subr.mxu0 0.0
    %672 = vmatpush1.msra.mxu0 0.0
    %673 = vmatprep.subr.mxu0 0.0
    %674 = vmatpush1.msra.mxu0 0.0
    %675 = vmatprep.subr.mxu0 0.0
    %676 = vmatpush1.msra.mxu0 0.0
    %677 = vmatprep.subr.mxu0 0.0
    %678 = vmatpush1.msra.mxu0 0.0
    %679 = vmatprep.subr.mxu0 0.0
    %680 = vmatpush1.msra.mxu0 0.0
    %681 = vmatprep.subr.mxu0 0.0
    %682 = vmatpush1.msra.mxu0 0.0
    %683 = vmatprep.subr.mxu0 0.0
    %684 = vmatpush1.msra.mxu0 0.0
    %685 = vmatprep.subr.mxu0 0.0
    %686 = vmatpush1.msra.mxu0 0.0
    %687 = vmatprep.mubr.f32.mxu0 0.0
    %688 = vmatmul.mubr.f32.gmra.mrb[0].mxu0 %v622
    %v689 = vpop.f32.mrb[0].mxu0
    %v690 = vadd.f32 %v259, %v689
    %v691 = vpop.f32.mrb[0].mxu0
    %692 = vdwg.mxu0
    %v693 = vtanh.pop %v690
    %694 = vmatprep.subr.mxu0 0.0
    %695 = vmatpush1.msra.mxu0 %v139
    %696 = vmatprep.subr.mxu0 0.0
    %697 = vmatpush1.msra.mxu0 %v140
    %698 = vmatprep.subr.mxu0 0.0
    %699 = vmatpush1.msra.mxu0 %v141
    %700 = vmatprep.subr.mxu0 0.0
    %701 = vmatpush1.msra.mxu0 %v142
    %702 = vmatprep.subr.mxu0 0.0
    %703 = vmatpush1.msra.mxu0 %v143
    %704 = vmatprep.subr.mxu0 0.0
    %705 = vmatpush1.msra.mxu0 %v144
    %706 = vmatprep.subr.mxu0 0.0
    %707 = vmatpush1.msra.mxu0 %v145
    %708 = vmatprep.subr.mxu0 0.0
    %709 = vmatpush1.msra.mxu0 %v146
    %710 = vmatprep.subr.mxu0 0.0
    %711 = vmatpush1.msra.mxu0 %v147
    %712 = vmatprep.subr.mxu0 0.0
    %713 = vmatpush1.msra.mxu0 %v148
    %714 = vmatprep.subr.mxu0 0.0
    %715 = vmatpush1.msra.mxu0 %v149
    %716 = vmatprep.subr.mxu0 0.0
    %717 = vmatpush1.msra.mxu0 %v150
    %718 = vmatprep.subr.mxu0 0.0
    %719 = vmatpush1.msra.mxu0 %v151
    %720 = vmatprep.subr.mxu0 0.0
    %721 = vmatpush1.msra.mxu0 %v152
    %722 = vmatprep.subr.mxu0 0.0
    %723 = vmatpush1.msra.mxu0 %v153
    %724 = vmatprep.subr.mxu0 0.0
    %725 = vmatpush1.msra.mxu0 %v154
    %726 = vmatprep.subr.mxu0 0.0
    %727 = vmatpush1.msra.mxu0 0.0
    %728 = vmatprep.subr.mxu0 0.0
    %729 = vmatpush1.msra.mxu0 0.0
    %730 = vmatprep.subr.mxu0 0.0
    %731 = vmatpush1.msra.mxu0 0.0
    %732 = vmatprep.subr.mxu0 0.0
    %733 = vmatpush1.msra.mxu0 0.0
    %734 = vmatprep.subr.mxu0 0.0
    %735 = vmatpush1.msra.mxu0 0.0
    %736 = vmatprep.subr.mxu0 0.0
    %737 = vmatpush1.msra.mxu0 0.0
    %738 = vmatprep.subr.mxu0 0.0
    %739 = vmatpush1.msra.mxu0 0.0
    %740 = vmatprep.subr.mxu0 0.0
    %741 = vmatpush1.msra.mxu0 0.0
    %742 = vmatprep.subr.mxu0 0.0
    %743 = vmatpush1.msra.mxu0 0.0
    %744 = vmatprep.subr.mxu0 0.0
    %745 = vmatpush1.msra.mxu0 0.0
    %746 = vmatprep.subr.mxu0 0.0
    %747 = vmatpush1.msra.mxu0 0.0
    %748 = vmatprep.subr.mxu0 0.0
    %749 = vmatpush1.msra.mxu0 0.0
    %750 = vmatprep.subr.mxu0 0.0
    %751 = vmatpush1.msra.mxu0 0.0
    %752 = vmatprep.subr.mxu0 0.0
    %753 = vmatpush1.msra.mxu0 0.0
    %754 = vmatprep.subr.mxu0 0.0
    %755 = vmatpush1.msra.mxu0 0.0
    %756 = vmatprep.subr.mxu0 0.0
    %757 = vmatpush1.msra.mxu0 0.0
    %758 = vmatprep.mubr.f32.mxu0 0.0
    %759 = vmatmul.mubr.f32.gmra.mrb[0].mxu0 %v693
    %v760 = vpop.f32.mrb[0].mxu0
    %v761 = vadd.f32 %v264, %v760
    %v762 = vpop.f32.mrb[0].mxu0
    %763 = vdwg.mxu0
    %v764 = vtanh.pop %v761
    %v765 = vld [vmem:[#allocation8] sm:$0xff]
    %v766 = vld [vmem:[#allocation8 + $0x8] sm:$0xff]
    %v767 = vld [vmem:[#allocation8 + $0x10] sm:$0xff]
    %v768 = vld [vmem:[#allocation8 + $0x18] sm:$0xff]
    %v769 = vld [vmem:[#allocation8 + $0x20] sm:$0xff]
    %v770 = vld [vmem:[#allocation8 + $0x28] sm:$0xff]
    %v771 = vld [vmem:[#allocation8 + $0x30] sm:$0xff]
    %v772 = vld [vmem:[#allocation8 + $0x38] sm:$0xff]
    %v773 = vld [vmem:[#allocation8 + $0x40] sm:$0xff]
    %v774 = vld [vmem:[#allocation8 + $0x48] sm:$0xff]
    %v775 = vld [vmem:[#allocation8 + $0x50] sm:$0xff]
    %v776 = vld [vmem:[#allocation8 + $0x58] sm:$0xff]
    %v777 = vld [vmem:[#allocation8 + $0x60] sm:$0xff]
    %v778 = vld [vmem:[#allocation8 + $0x68] sm:$0xff]
    %v779 = vld [vmem:[#allocation8 + $0x70] sm:$0xff]
    %v780 = vld [vmem:[#allocation8 + $0x78] sm:$0xff]
    %v781 = vld [vmem:[#allocation10] sm:$0xff]
    %v782 = vld [vmem:[#allocation10 + $0x8] sm:$0xff]
    %v783 = vld [vmem:[#allocation10 + $0x10] sm:$0xff]
    %v784 = vld [vmem:[#allocation10 + $0x18] sm:$0xff]
    %v785 = vld [vmem:[#allocation10 + $0x20] sm:$0xff]
    %v786 = vld [vmem:[#allocation10 + $0x28] sm:$0xff]
    %v787 = vld [vmem:[#allocation10 + $0x30] sm:$0xff]
    %v788 = vld [vmem:[#allocation10 + $0x38] sm:$0xff]
    %v789 = vld [vmem:[#allocation10 + $0x40] sm:$0xff]
    %v790 = vld [vmem:[#allocation10 + $0x48] sm:$0xff]
    %v791 = vld [vmem:[#allocation10 + $0x50] sm:$0xff]
    %v792 = vld [vmem:[#allocation10 + $0x58] sm:$0xff]
    %v793 = vld [vmem:[#allocation10 + $0x60] sm:$0xff]
    %v794 = vld [vmem:[#allocation10 + $0x68] sm:$0xff]
    %v795 = vld [vmem:[#allocation10 + $0x70] sm:$0xff]
    %v796 = vld [vmem:[#allocation10 + $0x78] sm:$0xff]
    %v797 = vld [vmem:[%s6] sm:$0x1]
    %v799 = vlaneseq
    %v800 = vshrl.u32 %v799, 7
    %v801 = vsub.s32 0, %v800
    %v802 = vrot.slane %v797, %v801
    %804 = vmatprep.subr.mxu0 0.0
    %805 = vmatpush1.msra.mxu0 %v765
    %806 = vmatprep.subr.mxu0 0.0
    %807 = vmatpush1.msra.mxu0 %v766
    %808 = vmatprep.subr.mxu0 0.0
    %809 = vmatpush1.msra.mxu0 %v767
    %810 = vmatprep.subr.mxu0 0.0
    %811 = vmatpush1.msra.mxu0 %v768
    %812 = vmatprep.subr.mxu0 0.0
    %813 = vmatpush1.msra.mxu0 %v769
    %814 = vmatprep.subr.mxu0 0.0
    %815 = vmatpush1.msra.mxu0 %v770
    %816 = vmatprep.subr.mxu0 0.0
    %817 = vmatpush1.msra.mxu0 %v771
    %818 = vmatprep.subr.mxu0 0.0
    %819 = vmatpush1.msra.mxu0 %v772
    %820 = vmatprep.subr.mxu0 0.0
    %821 = vmatpush1.msra.mxu0 %v773
    %822 = vmatprep.subr.mxu0 0.0
    %823 = vmatpush1.msra.mxu0 %v774
    %824 = vmatprep.subr.mxu0 0.0
    %825 = vmatpush1.msra.mxu0 %v775
    %826 = vmatprep.subr.mxu0 0.0
    %827 = vmatpush1.msra.mxu0 %v776
    %828 = vmatprep.subr.mxu0 0.0
    %829 = vmatpush1.msra.mxu0 %v777
    %830 = vmatprep.subr.mxu0 0.0
    %831 = vmatpush1.msra.mxu0 %v778
    %832 = vmatprep.subr.mxu0 0.0
    %833 = vmatpush1.msra.mxu0 %v779
    %834 = vmatprep.subr.mxu0 0.0
    %835 = vmatpush1.msra.mxu0 %v780
    %836 = vmatprep.subr.mxu0 0.0
    %837 = vmatpush1.msra.mxu0 0.0
    %838 = vmatprep.subr.mxu0 0.0
    %839 = vmatpush1.msra.mxu0 0.0
    %840 = vmatprep.subr.mxu0 0.0
    %841 = vmatpush1.msra.mxu0 0.0
    %842 = vmatprep.subr.mxu0 0.0
    %843 = vmatpush1.msra.mxu0 0.0
    %844 = vmatprep.subr.mxu0 0.0
    %845 = vmatpush1.msra.mxu0 0.0
    %846 = vmatprep.subr.mxu0 0.0
    %847 = vmatpush1.msra.mxu0 0.0
    %848 = vmatprep.subr.mxu0 0.0
    %849 = vmatpush1.msra.mxu0 0.0
    %850 = vmatprep.subr.mxu0 0.0
    %851 = vmatpush1.msra.mxu0 0.0
    %852 = vmatprep.subr.mxu0 0.0
    %853 = vmatpush1.msra.mxu0 0.0
    %854 = vmatprep.subr.mxu0 0.0
    %855 = vmatpush1.msra.mxu0 0.0
    %856 = vmatprep.subr.mxu0 0.0
    %857 = vmatpush1.msra.mxu0 0.0
    %858 = vmatprep.subr.mxu0 0.0
    %859 = vmatpush1.msra.mxu0 0.0
    %860 = vmatprep.subr.mxu0 0.0
    %861 = vmatpush1.msra.mxu0 0.0
    %862 = vmatprep.subr.mxu0 0.0
    %863 = vmatpush1.msra.mxu0 0.0
    %864 = vmatprep.subr.mxu0 0.0
    %865 = vmatpush1.msra.mxu0 0.0
    %866 = vmatprep.subr.mxu0 0.0
    %867 = vmatpush1.msra.mxu0 0.0
    %868 = vmatprep.mubr.f32.mxu0 0.0
    %869 = vmatmul.mubr.f32.gmra.mrb[0].mxu0 %v267
    %v870 = vpop.f32.mrb[0].mxu0
    %v871 = vadd.f32 %v802, %v870
    %v872 = vpop.f32.mrb[0].mxu0
    %873 = vmatprep.mubr.f32.mxu0 0.0
    %874 = vmatmul.mubr.f32.gmra.mrb[0].mxu0 %v338
    %v875 = vpop.f32.mrb[0].mxu0
    %v876 = vadd.f32 %v802, %v875
    %v877 = vpop.f32.mrb[0].mxu0
    %878 = vmatprep.mubr.f32.mxu0 0.0
    %879 = vmatmul.mubr.f32.gmra.mrb[0].mxu0 %v409
    %v880 = vpop.f32.mrb[0].mxu0
    %v881 = vadd.f32 %v802, %v880
    %v882 = vpop.f32.mrb[0].mxu0
    %883 = vmatprep.mubr.f32.mxu0 0.0
    %884 = vmatmul.mubr.f32.gmra.mrb[0].mxu0 %v480
    %v885 = vpop.f32.mrb[0].mxu0
    %v886 = vadd.f32 %v802, %v885
    %v887 = vpop.f32.mrb[0].mxu0
    %888 = vmatprep.mubr.f32.mxu0 0.0
    %889 = vmatmul.mubr.f32.gmra.mrb[0].mxu0 %v551
    %v890 = vpop.f32.mrb[0].mxu0
    %v891 = vadd.f32 %v802, %v890
    %v892 = vpop.f32.mrb[0].mxu0
    %893 = vmatprep.mubr.f32.mxu0 0.0
    %894 = vmatmul.mubr.f32.gmra.mrb[0].mxu0 %v622
    %v895 = vpop.f32.mrb[0].mxu0
    %v896 = vadd.f32 %v802, %v895
    %v897 = vpop.f32.mrb[0].mxu0
    %898 = vmatprep.mubr.f32.mxu0 0.0
    %899 = vmatmul.mubr.f32.gmra.mrb[0].mxu0 %v693
    %v900 = vpop.f32.mrb[0].mxu0
    %v901 = vadd.f32 %v802, %v900
    %v902 = vpop.f32.mrb[0].mxu0
    %903 = vmatprep.mubr.f32.mxu0 0.0
    %904 = vmatmul.mubr.f32.gmra.mrb[0].mxu0 %v764
    %v905 = vpop.f32.mrb[0].mxu0
    %v906 = vadd.f32 %v802, %v905
    %v907 = vpop.f32.mrb[0].mxu0
    %908 = vdwg.mxu0
    %v909 = vtanh.pop %v871
    %910 = vmatprep.subr.mxu0 0.0
    %911 = vmatpush1.msra.mxu0 %v781
    %912 = vmatprep.subr.mxu0 0.0
    %913 = vmatpush1.msra.mxu0 %v782
    %914 = vmatprep.subr.mxu0 0.0
    %915 = vmatpush1.msra.mxu0 %v783
    %916 = vmatprep.subr.mxu0 0.0
    %917 = vmatpush1.msra.mxu0 %v784
    %918 = vmatprep.subr.mxu0 0.0
    %919 = vmatpush1.msra.mxu0 %v785
    %920 = vmatprep.subr.mxu0 0.0
    %921 = vmatpush1.msra.mxu0 %v786
    %922 = vmatprep.subr.mxu0 0.0
    %923 = vmatpush1.msra.mxu0 %v787
    %924 = vmatprep.subr.mxu0 0.0
    %925 = vmatpush1.msra.mxu0 %v788
    %926 = vmatprep.subr.mxu0 0.0
    %927 = vmatpush1.msra.mxu0 %v789
    %928 = vmatprep.subr.mxu0 0.0
    %929 = vmatpush1.msra.mxu0 %v790
    %930 = vmatprep.subr.mxu0 0.0
    %931 = vmatpush1.msra.mxu0 %v791
    %932 = vmatprep.subr.mxu0 0.0
    %933 = vmatpush1.msra.mxu0 %v792
    %934 = vmatprep.subr.mxu0 0.0
    %935 = vmatpush1.msra.mxu0 %v793
    %936 = vmatprep.subr.mxu0 0.0
    %937 = vmatpush1.msra.mxu0 %v794
    %938 = vmatprep.subr.mxu0 0.0
    %939 = vmatpush1.msra.mxu0 %v795
    %940 = vmatprep.subr.mxu0 0.0
    %941 = vmatpush1.msra.mxu0 %v796
    %942 = vmatprep.subr.mxu0 0.0
    %943 = vmatpush1.msra.mxu0 0.0
    %944 = vmatprep.subr.mxu0 0.0
    %945 = vmatpush1.msra.mxu0 0.0
    %946 = vmatprep.subr.mxu0 0.0
    %947 = vmatpush1.msra.mxu0 0.0
    %948 = vmatprep.subr.mxu0 0.0
    %949 = vmatpush1.msra.mxu0 0.0
    %950 = vmatprep.subr.mxu0 0.0
    %951 = vmatpush1.msra.mxu0 0.0
    %952 = vmatprep.subr.mxu0 0.0
    %953 = vmatpush1.msra.mxu0 0.0
    %954 = vmatprep.subr.mxu0 0.0
    %955 = vmatpush1.msra.mxu0 0.0
    %956 = vmatprep.subr.mxu0 0.0
    %957 = vmatpush1.msra.mxu0 0.0
    %958 = vmatprep.subr.mxu0 0.0
    %959 = vmatpush1.msra.mxu0 0.0
    %960 = vmatprep.subr.mxu0 0.0
    %961 = vmatpush1.msra.mxu0 0.0
    %962 = vmatprep.subr.mxu0 0.0
    %963 = vmatpush1.msra.mxu0 0.0
    %964 = vmatprep.subr.mxu0 0.0
    %965 = vmatpush1.msra.mxu0 0.0
    %966 = vmatprep.subr.mxu0 0.0
    %967 = vmatpush1.msra.mxu0 0.0
    %968 = vmatprep.subr.mxu0 0.0
    %969 = vmatpush1.msra.mxu0 0.0
    %970 = vmatprep.subr.mxu0 0.0
    %971 = vmatpush1.msra.mxu0 0.0
    %972 = vmatprep.subr.mxu0 0.0
    %973 = vmatpush1.msra.mxu0 0.0
    %974 = vmatprep.mubr.f32.mxu0 0.0
    %975 = vmatmul.mubr.f32.gmra.mrb[0].mxu0 %v909
    %v976 = vpop.f32.mrb[0].mxu0
    %v977 = vadd.f32 %v876, %v976
    %v978 = vpop.f32.mrb[0].mxu0
    %979 = vdwg.mxu0
    %v980 = vtanh.pop %v977
    %981 = vmatprep.subr.mxu0 0.0
    %982 = vmatpush1.msra.mxu0 %v781
    %983 = vmatprep.subr.mxu0 0.0
    %984 = vmatpush1.msra.mxu0 %v782
    %985 = vmatprep.subr.mxu0 0.0
    %986 = vmatpush1.msra.mxu0 %v783
    %987 = vmatprep.subr.mxu0 0.0
    %988 = vmatpush1.msra.mxu0 %v784
    %989 = vmatprep.subr.mxu0 0.0
    %990 = vmatpush1.msra.mxu0 %v785
    %991 = vmatprep.subr.mxu0 0.0
    %992 = vmatpush1.msra.mxu0 %v786
    %993 = vmatprep.subr.mxu0 0.0
    %994 = vmatpush1.msra.mxu0 %v787
    %995 = vmatprep.subr.mxu0 0.0
    %996 = vmatpush1.msra.mxu0 %v788
    %997 = vmatprep.subr.mxu0 0.0
    %998 = vmatpush1.msra.mxu0 %v789
    %999 = vmatprep.subr.mxu0 0.0
    %1000 = vmatpush1.msra.mxu0 %v790
    %1001 = vmatprep.subr.mxu0 0.0
    %1002 = vmatpush1.msra.mxu0 %v791
    %1003 = vmatprep.subr.mxu0 0.0
    %1004 = vmatpush1.msra.mxu0 %v792
    %1005 = vmatprep.subr.mxu0 0.0
    %1006 = vmatpush1.msra.mxu0 %v793
    %1007 = vmatprep.subr.mxu0 0.0
    %1008 = vmatpush1.msra.mxu0 %v794
    %1009 = vmatprep.subr.mxu0 0.0
    %1010 = vmatpush1.msra.mxu0 %v795
    %1011 = vmatprep.subr.mxu0 0.0
    %1012 = vmatpush1.msra.mxu0 %v796
    %1013 = vmatprep.subr.mxu0 0.0
    %1014 = vmatpush1.msra.mxu0 0.0
    %1015 = vmatprep.subr.mxu0 0.0
    %1016 = vmatpush1.msra.mxu0 0.0
    %1017 = vmatprep.subr.mxu0 0.0
    %1018 = vmatpush1.msra.mxu0 0.0
    %1019 = vmatprep.subr.mxu0 0.0
    %1020 = vmatpush1.msra.mxu0 0.0
    %1021 = vmatprep.subr.mxu0 0.0
    %1022 = vmatpush1.msra.mxu0 0.0
    %1023 = vmatprep.subr.mxu0 0.0
    %1024 = vmatpush1.msra.mxu0 0.0
    %1025 = vmatprep.subr.mxu0 0.0
    %1026 = vmatpush1.msra.mxu0 0.0
    %1027 = vmatprep.subr.mxu0 0.0
    %1028 = vmatpush1.msra.mxu0 0.0
    %1029 = vmatprep.subr.mxu0 0.0
    %1030 = vmatpush1.msra.mxu0 0.0
    %1031 = vmatprep.subr.mxu0 0.0
    %1032 = vmatpush1.msra.mxu0 0.0
    %1033 = vmatprep.subr.mxu0 0.0
    %1034 = vmatpush1.msra.mxu0 0.0
    %1035 = vmatprep.subr.mxu0 0.0
    %1036 = vmatpush1.msra.mxu0 0.0
    %1037 = vmatprep.subr.mxu0 0.0
    %1038 = vmatpush1.msra.mxu0 0.0
    %1039 = vmatprep.subr.mxu0 0.0
    %1040 = vmatpush1.msra.mxu0 0.0
    %1041 = vmatprep.subr.mxu0 0.0
    %1042 = vmatpush1.msra.mxu0 0.0
    %1043 = vmatprep.subr.mxu0 0.0
    %1044 = vmatpush1.msra.mxu0 0.0
    %1045 = vmatprep.mubr.f32.mxu0 0.0
    %1046 = vmatmul.mubr.f32.gmra.mrb[0].mxu0 %v980
    %v1047 = vpop.f32.mrb[0].mxu0
    %v1048 = vadd.f32 %v881, %v1047
    %v1049 = vpop.f32.mrb[0].mxu0
    %1050 = vdwg.mxu0
    %v1051 = vtanh.pop %v1048
    %1052 = vmatprep.subr.mxu0 0.0
    %1053 = vmatpush1.msra.mxu0 %v781
    %1054 = vmatprep.subr.mxu0 0.0
    %1055 = vmatpush1.msra.mxu0 %v782
    %1056 = vmatprep.subr.mxu0 0.0
    %1057 = vmatpush1.msra.mxu0 %v783
    %1058 = vmatprep.subr.mxu0 0.0
    %1059 = vmatpush1.msra.mxu0 %v784
    %1060 = vmatprep.subr.mxu0 0.0
    %1061 = vmatpush1.msra.mxu0 %v785
    %1062 = vmatprep.subr.mxu0 0.0
    %1063 = vmatpush1.msra.mxu0 %v786
    %1064 = vmatprep.subr.mxu0 0.0
    %1065 = vmatpush1.msra.mxu0 %v787
    %1066 = vmatprep.subr.mxu0 0.0
    %1067 = vmatpush1.msra.mxu0 %v788
    %1068 = vmatprep.subr.mxu0 0.0
    %1069 = vmatpush1.msra.mxu0 %v789
    %1070 = vmatprep.subr.mxu0 0.0
    %1071 = vmatpush1.msra.mxu0 %v790
    %1072 = vmatprep.subr.mxu0 0.0
    %1073 = vmatpush1.msra.mxu0 %v791
    %1074 = vmatprep.subr.mxu0 0.0
    %1075 = vmatpush1.msra.mxu0 %v792
    %1076 = vmatprep.subr.mxu0 0.0
    %1077 = vmatpush1.msra.mxu0 %v793
    %1078 = vmatprep.subr.mxu0 0.0
    %1079 = vmatpush1.msra.mxu0 %v794
    %1080 = vmatprep.subr.mxu0 0.0
    %1081 = vmatpush1.msra.mxu0 %v795
    %1082 = vmatprep.subr.mxu0 0.0
    %1083 = vmatpush1.msra.mxu0 %v796
    %1084 = vmatprep.subr.mxu0 0.0
    %1085 = vmatpush1.msra.mxu0 0.0
    %1086 = vmatprep.subr.mxu0 0.0
    %1087 = vmatpush1.msra.mxu0 0.0
    %1088 = vmatprep.subr.mxu0 0.0
    %1089 = vmatpush1.msra.mxu0 0.0
    %1090 = vmatprep.subr.mxu0 0.0
    %1091 = vmatpush1.msra.mxu0 0.0
    %1092 = vmatprep.subr.mxu0 0.0
    %1093 = vmatpush1.msra.mxu0 0.0
    %1094 = vmatprep.subr.mxu0 0.0
    %1095 = vmatpush1.msra.mxu0 0.0
    %1096 = vmatprep.subr.mxu0 0.0
    %1097 = vmatpush1.msra.mxu0 0.0
    %1098 = vmatprep.subr.mxu0 0.0
    %1099 = vmatpush1.msra.mxu0 0.0
    %1100 = vmatprep.subr.mxu0 0.0
    %1101 = vmatpush1.msra.mxu0 0.0
    %1102 = vmatprep.subr.mxu0 0.0
    %1103 = vmatpush1.msra.mxu0 0.0
    %1104 = vmatprep.subr.mxu0 0.0
    %1105 = vmatpush1.msra.mxu0 0.0
    %1106 = vmatprep.subr.mxu0 0.0
    %1107 = vmatpush1.msra.mxu0 0.0
    %1108 = vmatprep.subr.mxu0 0.0
    %1109 = vmatpush1.msra.mxu0 0.0
    %1110 = vmatprep.subr.mxu0 0.0
    %1111 = vmatpush1.msra.mxu0 0.0
    %1112 = vmatprep.subr.mxu0 0.0
    %1113 = vmatpush1.msra.mxu0 0.0
    %1114 = vmatprep.subr.mxu0 0.0
    %1115 = vmatpush1.msra.mxu0 0.0
    %1116 = vmatprep.mubr.f32.mxu0 0.0
    %1117 = vmatmul.mubr.f32.gmra.mrb[0].mxu0 %v1051
    %v1118 = vpop.f32.mrb[0].mxu0
    %v1119 = vadd.f32 %v886, %v1118
    %v1120 = vpop.f32.mrb[0].mxu0
    %1121 = vdwg.mxu0
    %v1122 = vtanh.pop %v1119
    %1123 = vmatprep.subr.mxu0 0.0
    %1124 = vmatpush1.msra.mxu0 %v781
    %1125 = vmatprep.subr.mxu0 0.0
    %1126 = vmatpush1.msra.mxu0 %v782
    %1127 = vmatprep.subr.mxu0 0.0
    %1128 = vmatpush1.msra.mxu0 %v783
    %1129 = vmatprep.subr.mxu0 0.0
    %1130 = vmatpush1.msra.mxu0 %v784
    %1131 = vmatprep.subr.mxu0 0.0
    %1132 = vmatpush1.msra.mxu0 %v785
    %1133 = vmatprep.subr.mxu0 0.0
    %1134 = vmatpush1.msra.mxu0 %v786
    %1135 = vmatprep.subr.mxu0 0.0
    %1136 = vmatpush1.msra.mxu0 %v787
    %1137 = vmatprep.subr.mxu0 0.0
    %1138 = vmatpush1.msra.mxu0 %v788
    %1139 = vmatprep.subr.mxu0 0.0
    %1140 = vmatpush1.msra.mxu0 %v789
    %1141 = vmatprep.subr.mxu0 0.0
    %1142 = vmatpush1.msra.mxu0 %v790
    %1143 = vmatprep.subr.mxu0 0.0
    %1144 = vmatpush1.msra.mxu0 %v791
    %1145 = vmatprep.subr.mxu0 0.0
    %1146 = vmatpush1.msra.mxu0 %v792
    %1147 = vmatprep.subr.mxu0 0.0
    %1148 = vmatpush1.msra.mxu0 %v793
    %1149 = vmatprep.subr.mxu0 0.0
    %1150 = vmatpush1.msra.mxu0 %v794
    %1151 = vmatprep.subr.mxu0 0.0
    %1152 = vmatpush1.msra.mxu0 %v795
    %1153 = vmatprep.subr.mxu0 0.0
    %1154 = vmatpush1.msra.mxu0 %v796
    %1155 = vmatprep.subr.mxu0 0.0
    %1156 = vmatpush1.msra.mxu0 0.0
    %1157 = vmatprep.subr.mxu0 0.0
    %1158 = vmatpush1.msra.mxu0 0.0
    %1159 = vmatprep.subr.mxu0 0.0
    %1160 = vmatpush1.msra.mxu0 0.0
    %1161 = vmatprep.subr.mxu0 0.0
    %1162 = vmatpush1.msra.mxu0 0.0
    %1163 = vmatprep.subr.mxu0 0.0
    %1164 = vmatpush1.msra.mxu0 0.0
    %1165 = vmatprep.subr.mxu0 0.0
    %1166 = vmatpush1.msra.mxu0 0.0
    %1167 = vmatprep.subr.mxu0 0.0
    %1168 = vmatpush1.msra.mxu0 0.0
    %1169 = vmatprep.subr.mxu0 0.0
    %1170 = vmatpush1.msra.mxu0 0.0
    %1171 = vmatprep.subr.mxu0 0.0
    %1172 = vmatpush1.msra.mxu0 0.0
    %1173 = vmatprep.subr.mxu0 0.0
    %1174 = vmatpush1.msra.mxu0 0.0
    %1175 = vmatprep.subr.mxu0 0.0
    %1176 = vmatpush1.msra.mxu0 0.0
    %1177 = vmatprep.subr.mxu0 0.0
    %1178 = vmatpush1.msra.mxu0 0.0
    %1179 = vmatprep.subr.mxu0 0.0
    %1180 = vmatpush1.msra.mxu0 0.0
    %1181 = vmatprep.subr.mxu0 0.0
    %1182 = vmatpush1.msra.mxu0 0.0
    %1183 = vmatprep.subr.mxu0 0.0
    %1184 = vmatpush1.msra.mxu0 0.0
    %1185 = vmatprep.subr.mxu0 0.0
    %1186 = vmatpush1.msra.mxu0 0.0
    %1187 = vmatprep.mubr.f32.mxu0 0.0
    %1188 = vmatmul.mubr.f32.gmra.mrb[0].mxu0 %v1122
    %v1189 = vpop.f32.mrb[0].mxu0
    %v1190 = vadd.f32 %v891, %v1189
    %v1191 = vpop.f32.mrb[0].mxu0
    %1192 = vdwg.mxu0
    %v1193 = vtanh.pop %v1190
    %1194 = vmatprep.subr.mxu0 0.0
    %1195 = vmatpush1.msra.mxu0 %v781
    %1196 = vmatprep.subr.mxu0 0.0
    %1197 = vmatpush1.msra.mxu0 %v782
    %1198 = vmatprep.subr.mxu0 0.0
    %1199 = vmatpush1.msra.mxu0 %v783
    %1200 = vmatprep.subr.mxu0 0.0
    %1201 = vmatpush1.msra.mxu0 %v784
    %1202 = vmatprep.subr.mxu0 0.0
    %1203 = vmatpush1.msra.mxu0 %v785
    %1204 = vmatprep.subr.mxu0 0.0
    %1205 = vmatpush1.msra.mxu0 %v786
    %1206 = vmatprep.subr.mxu0 0.0
    %1207 = vmatpush1.msra.mxu0 %v787
    %1208 = vmatprep.subr.mxu0 0.0
    %1209 = vmatpush1.msra.mxu0 %v788
    %1210 = vmatprep.subr.mxu0 0.0
    %1211 = vmatpush1.msra.mxu0 %v789
    %1212 = vmatprep.subr.mxu0 0.0
    %1213 = vmatpush1.msra.mxu0 %v790
    %1214 = vmatprep.subr.mxu0 0.0
    %1215 = vmatpush1.msra.mxu0 %v791
    %1216 = vmatprep.subr.mxu0 0.0
    %1217 = vmatpush1.msra.mxu0 %v792
    %1218 = vmatprep.subr.mxu0 0.0
    %1219 = vmatpush1.msra.mxu0 %v793
    %1220 = vmatprep.subr.mxu0 0.0
    %1221 = vmatpush1.msra.mxu0 %v794
    %1222 = vmatprep.subr.mxu0 0.0
    %1223 = vmatpush1.msra.mxu0 %v795
    %1224 = vmatprep.subr.mxu0 0.0
    %1225 = vmatpush1.msra.mxu0 %v796
    %1226 = vmatprep.subr.mxu0 0.0
    %1227 = vmatpush1.msra.mxu0 0.0
    %1228 = vmatprep.subr.mxu0 0.0
    %1229 = vmatpush1.msra.mxu0 0.0
    %1230 = vmatprep.subr.mxu0 0.0
    %1231 = vmatpush1.msra.mxu0 0.0
    %1232 = vmatprep.subr.mxu0 0.0
    %1233 = vmatpush1.msra.mxu0 0.0
    %1234 = vmatprep.subr.mxu0 0.0
    %1235 = vmatpush1.msra.mxu0 0.0
    %1236 = vmatprep.subr.mxu0 0.0
    %1237 = vmatpush1.msra.mxu0 0.0
    %1238 = vmatprep.subr.mxu0 0.0
    %1239 = vmatpush1.msra.mxu0 0.0
    %1240 = vmatprep.subr.mxu0 0.0
    %1241 = vmatpush1.msra.mxu0 0.0
    %1242 = vmatprep.subr.mxu0 0.0
    %1243 = vmatpush1.msra.mxu0 0.0
    %1244 = vmatprep.subr.mxu0 0.0
    %1245 = vmatpush1.msra.mxu0 0.0
    %1246 = vmatprep.subr.mxu0 0.0
    %1247 = vmatpush1.msra.mxu0 0.0
    %1248 = vmatprep.subr.mxu0 0.0
    %1249 = vmatpush1.msra.mxu0 0.0
    %1250 = vmatprep.subr.mxu0 0.0
    %1251 = vmatpush1.msra.mxu0 0.0
    %1252 = vmatprep.subr.mxu0 0.0
    %1253 = vmatpush1.msra.mxu0 0.0
    %1254 = vmatprep.subr.mxu0 0.0
    %1255 = vmatpush1.msra.mxu0 0.0
    %1256 = vmatprep.subr.mxu0 0.0
    %1257 = vmatpush1.msra.mxu0 0.0
    %1258 = vmatprep.mubr.f32.mxu0 0.0
    %1259 = vmatmul.mubr.f32.gmra.mrb[0].mxu0 %v1193
    %v1260 = vpop.f32.mrb[0].mxu0
    %v1261 = vadd.f32 %v896, %v1260
    %v1262 = vpop.f32.mrb[0].mxu0
    %1263 = vdwg.mxu0
    %v1264 = vtanh.pop %v1261
    %1265 = vmatprep.subr.mxu0 0.0
    %1266 = vmatpush1.msra.mxu0 %v781
    %1267 = vmatprep.subr.mxu0 0.0
    %1268 = vmatpush1.msra.mxu0 %v782
    %1269 = vmatprep.subr.mxu0 0.0
    %1270 = vmatpush1.msra.mxu0 %v783
    %1271 = vmatprep.subr.mxu0 0.0
    %1272 = vmatpush1.msra.mxu0 %v784
    %1273 = vmatprep.subr.mxu0 0.0
    %1274 = vmatpush1.msra.mxu0 %v785
    %1275 = vmatprep.subr.mxu0 0.0
    %1276 = vmatpush1.msra.mxu0 %v786
    %1277 = vmatprep.subr.mxu0 0.0
    %1278 = vmatpush1.msra.mxu0 %v787
    %1279 = vmatprep.subr.mxu0 0.0
    %1280 = vmatpush1.msra.mxu0 %v788
    %1281 = vmatprep.subr.mxu0 0.0
    %1282 = vmatpush1.msra.mxu0 %v789
    %1283 = vmatprep.subr.mxu0 0.0
    %1284 = vmatpush1.msra.mxu0 %v790
    %1285 = vmatprep.subr.mxu0 0.0
    %1286 = vmatpush1.msra.mxu0 %v791
    %1287 = vmatprep.subr.mxu0 0.0
    %1288 = vmatpush1.msra.mxu0 %v792
    %1289 = vmatprep.subr.mxu0 0.0
    %1290 = vmatpush1.msra.mxu0 %v793
    %1291 = vmatprep.subr.mxu0 0.0
    %1292 = vmatpush1.msra.mxu0 %v794
    %1293 = vmatprep.subr.mxu0 0.0
    %1294 = vmatpush1.msra.mxu0 %v795
    %1295 = vmatprep.subr.mxu0 0.0
    %1296 = vmatpush1.msra.mxu0 %v796
    %1297 = vmatprep.subr.mxu0 0.0
    %1298 = vmatpush1.msra.mxu0 0.0
    %1299 = vmatprep.subr.mxu0 0.0
    %1300 = vmatpush1.msra.mxu0 0.0
    %1301 = vmatprep.subr.mxu0 0.0
    %1302 = vmatpush1.msra.mxu0 0.0
    %1303 = vmatprep.subr.mxu0 0.0
    %1304 = vmatpush1.msra.mxu0 0.0
    %1305 = vmatprep.subr.mxu0 0.0
    %1306 = vmatpush1.msra.mxu0 0.0
    %1307 = vmatprep.subr.mxu0 0.0
    %1308 = vmatpush1.msra.mxu0 0.0
    %1309 = vmatprep.subr.mxu0 0.0
    %1310 = vmatpush1.msra.mxu0 0.0
    %1311 = vmatprep.subr.mxu0 0.0
    %1312 = vmatpush1.msra.mxu0 0.0
    %1313 = vmatprep.subr.mxu0 0.0
    %1314 = vmatpush1.msra.mxu0 0.0
    %1315 = vmatprep.subr.mxu0 0.0
    %1316 = vmatpush1.msra.mxu0 0.0
    %1317 = vmatprep.subr.mxu0 0.0
    %1318 = vmatpush1.msra.mxu0 0.0
    %1319 = vmatprep.subr.mxu0 0.0
    %1320 = vmatpush1.msra.mxu0 0.0
    %1321 = vmatprep.subr.mxu0 0.0
    %1322 = vmatpush1.msra.mxu0 0.0
    %1323 = vmatprep.subr.mxu0 0.0
    %1324 = vmatpush1.msra.mxu0 0.0
    %1325 = vmatprep.subr.mxu0 0.0
    %1326 = vmatpush1.msra.mxu0 0.0
    %1327 = vmatprep.subr.mxu0 0.0
    %1328 = vmatpush1.msra.mxu0 0.0
    %1329 = vmatprep.mubr.f32.mxu0 0.0
    %1330 = vmatmul.mubr.f32.gmra.mrb[0].mxu0 %v1264
    %v1331 = vpop.f32.mrb[0].mxu0
    %v1332 = vadd.f32 %v901, %v1331
    %v1333 = vpop.f32.mrb[0].mxu0
    %1334 = vdwg.mxu0
    %v1335 = vtanh.pop %v1332
    %1336 = vmatprep.subr.mxu0 0.0
    %1337 = vmatpush1.msra.mxu0 %v781
    %1338 = vmatprep.subr.mxu0 0.0
    %1339 = vmatpush1.msra.mxu0 %v782
    %1340 = vmatprep.subr.mxu0 0.0
    %1341 = vmatpush1.msra.mxu0 %v783
    %1342 = vmatprep.subr.mxu0 0.0
    %1343 = vmatpush1.msra.mxu0 %v784
    %1344 = vmatprep.subr.mxu0 0.0
    %1345 = vmatpush1.msra.mxu0 %v785
    %1346 = vmatprep.subr.mxu0 0.0
    %1347 = vmatpush1.msra.mxu0 %v786
    %1348 = vmatprep.subr.mxu0 0.0
    %1349 = vmatpush1.msra.mxu0 %v787
    %1350 = vmatprep.subr.mxu0 0.0
    %1351 = vmatpush1.msra.mxu0 %v788
    %1352 = vmatprep.subr.mxu0 0.0
    %1353 = vmatpush1.msra.mxu0 %v789
    %1354 = vmatprep.subr.mxu0 0.0
    %1355 = vmatpush1.msra.mxu0 %v790
    %1356 = vmatprep.subr.mxu0 0.0
    %1357 = vmatpush1.msra.mxu0 %v791
    %1358 = vmatprep.subr.mxu0 0.0
    %1359 = vmatpush1.msra.mxu0 %v792
    %1360 = vmatprep.subr.mxu0 0.0
    %1361 = vmatpush1.msra.mxu0 %v793
    %1362 = vmatprep.subr.mxu0 0.0
    %1363 = vmatpush1.msra.mxu0 %v794
    %1364 = vmatprep.subr.mxu0 0.0
    %1365 = vmatpush1.msra.mxu0 %v795
    %1366 = vmatprep.subr.mxu0 0.0
    %1367 = vmatpush1.msra.mxu0 %v796
    %1368 = vmatprep.subr.mxu0 0.0
    %1369 = vmatpush1.msra.mxu0 0.0
    %1370 = vmatprep.subr.mxu0 0.0
    %1371 = vmatpush1.msra.mxu0 0.0
    %1372 = vmatprep.subr.mxu0 0.0
    %1373 = vmatpush1.msra.mxu0 0.0
    %1374 = vmatprep.subr.mxu0 0.0
    %1375 = vmatpush1.msra.mxu0 0.0
    %1376 = vmatprep.subr.mxu0 0.0
    %1377 = vmatpush1.msra.mxu0 0.0
    %1378 = vmatprep.subr.mxu0 0.0
    %1379 = vmatpush1.msra.mxu0 0.0
    %1380 = vmatprep.subr.mxu0 0.0
    %1381 = vmatpush1.msra.mxu0 0.0
    %1382 = vmatprep.subr.mxu0 0.0
    %1383 = vmatpush1.msra.mxu0 0.0
    %1384 = vmatprep.subr.mxu0 0.0
    %1385 = vmatpush1.msra.mxu0 0.0
    %1386 = vmatprep.subr.mxu0 0.0
    %1387 = vmatpush1.msra.mxu0 0.0
    %1388 = vmatprep.subr.mxu0 0.0
    %1389 = vmatpush1.msra.mxu0 0.0
    %1390 = vmatprep.subr.mxu0 0.0
    %1391 = vmatpush1.msra.mxu0 0.0
    %1392 = vmatprep.subr.mxu0 0.0
    %1393 = vmatpush1.msra.mxu0 0.0
    %1394 = vmatprep.subr.mxu0 0.0
    %1395 = vmatpush1.msra.mxu0 0.0
    %1396 = vmatprep.subr.mxu0 0.0
    %1397 = vmatpush1.msra.mxu0 0.0
    %1398 = vmatprep.subr.mxu0 0.0
    %1399 = vmatpush1.msra.mxu0 0.0
    %1400 = vmatprep.mubr.f32.mxu0 0.0
    %1401 = vmatmul.mubr.f32.gmra.mrb[0].mxu0 %v1335
    %v1402 = vpop.f32.mrb[0].mxu0
    %v1403 = vadd.f32 %v906, %v1402
    %v1404 = vpop.f32.mrb[0].mxu0
    %1405 = vdwg.mxu0
    %v1406 = vtanh.pop %v1403
    %v1407 = vld [vmem:[#allocation11] sm:$0xff]
    %v1408 = vld [vmem:[#allocation11 + $0x8] sm:$0xff]
    %v1409 = vld [vmem:[#allocation11 + $0x10] sm:$0xff]
    %v1410 = vld [vmem:[#allocation11 + $0x18] sm:$0xff]
    %v1411 = vld [vmem:[#allocation11 + $0x20] sm:$0xff]
    %v1412 = vld [vmem:[#allocation11 + $0x28] sm:$0xff]
    %v1413 = vld [vmem:[#allocation11 + $0x30] sm:$0xff]
    %v1414 = vld [vmem:[#allocation11 + $0x38] sm:$0xff]
    %v1415 = vld [vmem:[#allocation11 + $0x40] sm:$0xff]
    %v1416 = vld [vmem:[#allocation11 + $0x48] sm:$0xff]
    %v1417 = vld [vmem:[#allocation11 + $0x50] sm:$0xff]
    %v1418 = vld [vmem:[#allocation11 + $0x58] sm:$0xff]
    %v1419 = vld [vmem:[#allocation11 + $0x60] sm:$0xff]
    %v1420 = vld [vmem:[#allocation11 + $0x68] sm:$0xff]
    %v1421 = vld [vmem:[#allocation11 + $0x70] sm:$0xff]
    %v1422 = vld [vmem:[#allocation11 + $0x78] sm:$0xff]
    %v1423 = vld [vmem:[%s8] sm:$0x1]
    %v1425 = vlaneseq
    %v1426 = vshrl.u32 %v1425, 7
    %v1427 = vsub.s32 0, %v1426
    %v1428 = vrot.slane %v1423, %v1427
    %1430 = vmatprep.subr.mxu0 0.0
    %1431 = vmatpush1.msra.mxu0 %v1407
    %1432 = vmatprep.subr.mxu0 0.0
    %1433 = vmatpush1.msra.mxu0 %v1408
    %1434 = vmatprep.subr.mxu0 0.0
    %1435 = vmatpush1.msra.mxu0 %v1409
    %1436 = vmatprep.subr.mxu0 0.0
    %1437 = vmatpush1.msra.mxu0 %v1410
    %1438 = vmatprep.subr.mxu0 0.0
    %1439 = vmatpush1.msra.mxu0 %v1411
    %1440 = vmatprep.subr.mxu0 0.0
    %1441 = vmatpush1.msra.mxu0 %v1412
    %1442 = vmatprep.subr.mxu0 0.0
    %1443 = vmatpush1.msra.mxu0 %v1413
    %1444 = vmatprep.subr.mxu0 0.0
    %1445 = vmatpush1.msra.mxu0 %v1414
    %1446 = vmatprep.subr.mxu0 0.0
    %1447 = vmatpush1.msra.mxu0 %v1415
    %1448 = vmatprep.subr.mxu0 0.0
    %1449 = vmatpush1.msra.mxu0 %v1416
    %1450 = vmatprep.subr.mxu0 0.0
    %1451 = vmatpush1.msra.mxu0 %v1417
    %1452 = vmatprep.subr.mxu0 0.0
    %1453 = vmatpush1.msra.mxu0 %v1418
    %1454 = vmatprep.subr.mxu0 0.0
    %1455 = vmatpush1.msra.mxu0 %v1419
    %1456 = vmatprep.subr.mxu0 0.0
    %1457 = vmatpush1.msra.mxu0 %v1420
    %1458 = vmatprep.subr.mxu0 0.0
    %1459 = vmatpush1.msra.mxu0 %v1421
    %1460 = vmatprep.subr.mxu0 0.0
    %1461 = vmatpush1.msra.mxu0 %v1422
    %1462 = vmatprep.subr.mxu0 0.0
    %1463 = vmatpush1.msra.mxu0 0.0
    %1464 = vmatprep.subr.mxu0 0.0
    %1465 = vmatpush1.msra.mxu0 0.0
    %1466 = vmatprep.subr.mxu0 0.0
    %1467 = vmatpush1.msra.mxu0 0.0
    %1468 = vmatprep.subr.mxu0 0.0
    %1469 = vmatpush1.msra.mxu0 0.0
    %1470 = vmatprep.subr.mxu0 0.0
    %1471 = vmatpush1.msra.mxu0 0.0
    %1472 = vmatprep.subr.mxu0 0.0
    %1473 = vmatpush1.msra.mxu0 0.0
    %1474 = vmatprep.subr.mxu0 0.0
    %1475 = vmatpush1.msra.mxu0 0.0
    %1476 = vmatprep.subr.mxu0 0.0
    %1477 = vmatpush1.msra.mxu0 0.0
    %1478 = vmatprep.subr.mxu0 0.0
    %1479 = vmatpush1.msra.mxu0 0.0
    %1480 = vmatprep.subr.mxu0 0.0
    %1481 = vmatpush1.msra.mxu0 0.0
    %1482 = vmatprep.subr.mxu0 0.0
    %1483 = vmatpush1.msra.mxu0 0.0
    %1484 = vmatprep.subr.mxu0 0.0
    %1485 = vmatpush1.msra.mxu0 0.0
    %1486 = vmatprep.subr.mxu0 0.0
    %1487 = vmatpush1.msra.mxu0 0.0
    %1488 = vmatprep.subr.mxu0 0.0
    %1489 = vmatpush1.msra.mxu0 0.0
    %1490 = vmatprep.subr.mxu0 0.0
    %1491 = vmatpush1.msra.mxu0 0.0
    %1492 = vmatprep.subr.mxu0 0.0
    %1493 = vmatpush1.msra.mxu0 0.0
    %1494 = vmatprep.mubr.f32.mxu0 0.0
    %1495 = vmatmul.mubr.f32.gmra.mrb[0].mxu0 %v1406
    %v1496 = vpop.f32.mrb[0].mxu0
    %v1497 = vadd.f32 %v1428, %v1496
    %v1498 = vpop.f32.mrb[0].mxu0
    %1499 = vdwg.mxu0
    %1500 = vst [vmem:[#allocation13] sm:$0xff] %v1497
    // Predicated region
    $region62: #{tpu_custom_call.1} parent=1 // pred_check
      _
    $region63: #{tpu_custom_call.1} parent=1 // pred_check_branch
      %1502 = sbr.rel (0) target = $region65
    $region64: #{tpu_custom_call.1} parent=1 // pred_region
      %s1504 = ssub.s32 128, 128
      %1505 = vsyncadd [#allocation4], %s1504
      %s1507 = sshll.u32 [#allocation13], 4
      %s1508 = int_to_ptr.vmem [resolvable:$true] %s1507
      %1510 = dma.vmem_to_hbm [thread:$0]  %s1508, 128, %s9, [#allocation4]
    $region65: #{tpu_custom_call.1} parent=1 // pred_fallthru
      _
    // Predicated region
    $region66: #{tpu_custom_call.1} parent=1 // pred_check
      _
    $region67: #{tpu_custom_call.1} parent=1 // pred_check_branch
      %1512 = sbr.rel (0) target = $region69
    $region68: #{tpu_custom_call.1} parent=1 // pred_region
      %1513 = dma.done [#allocation4], 128
    $region69: #{tpu_custom_call.1} parent=1 // pred_fallthru
      _
    %1514 = vsyncpa [#allocation3], 1
    %1515 = vsyncpa [#allocation6], 1
    %1516 = vsyncpa [#allocation9], 1
    %1517 = vsyncpa [#allocation12], 1
    %1518 = vsyncpa [#allocation4], 1

</llo_original>
